<compile_context>
chip_gen: v5e
topology: v5e:2x2
jax: 0.10.0
libtpu: 0.0.40
codegen_flags: <defaults>
</compile_context>

<pallas_src>
import jax
import jax.numpy as jnp
import numpy as np
from jax import lax
from jax.experimental import pallas as pl
from jax.experimental.pallas import tpu as pltpu


def _cfem_left_kernel(r_ref, d_ref, a_ref, w1_ref, w2_ref,
                      r_out_ref, d_out_ref, fuse_ref):
    """One batch element per grid step.  Blocks are (1, H, W, C) NHWC tiles."""
    r = r_ref[0]                       # (H, W, C), input dtype
    d = d_ref[0]
    H, W, C = r.shape

    # ---- spatial attention on r * d: 7x7 conv (padding=3) as ONE matmul ----
    m = jnp.max(r * d, axis=-1).astype(jnp.float32)          # (H, W)
    row = lax.broadcasted_iota(jnp.int32, (H, W), 0)
    parts = []
    for ki in range(7):                # XLU sublane rolls, VPU edge masks
        off = ki - 3                   # want shifted[i, :] = m[i + off, :]
        s = (-off) % H
        rolled = m if s == 0 else pltpu.roll(m, shift=s, axis=0)
        ok = jnp.logical_and(row + off >= 0, row + off < H)
        parts.append(jnp.where(ok, rolled, 0.0))
    slab = jnp.concatenate(parts, axis=1)                    # (H, 7W)
    conv = jnp.dot(slab, a_ref[...],
                   preferred_element_type=jnp.float32)       # (H, W)
    sa = jax.nn.sigmoid(conv).astype(r.dtype)                 # (H, W)
    sa_b = jnp.broadcast_to(sa[:, :, None], (H, W, C))        # hoisted splat

    # ---- channel attention (adaptive max pool -> 1x1-conv MLP), batched ----
    # Reduce each product immediately so the (H, W, C) temp dies before the
    # next one is materialized (keeps live VMEM temporaries to ~1 block).
    pooled_r = jnp.max((r * sa_b).reshape(H * W, C), axis=0)
    pooled_d = jnp.max((d * sa_b).reshape(H * W, C), axis=0)
    pooled = jnp.stack([pooled_r, pooled_d], axis=0).astype(jnp.float32)  # (2, C)

    w1 = w1_ref[...].astype(jnp.float32)                      # (2, C//16, C)
    w2 = w2_ref[...].astype(jnp.float32)                      # (2, C, C//16)
    hidden = jnp.maximum(jnp.sum(w1 * pooled[:, None, :], axis=-1), 0.0)   # (2, C//16)
    att = jax.nn.sigmoid(jnp.sum(w2 * hidden[:, None, :], axis=-1))        # (2, C)

    # ---- final fusion -------------------------------------------------------
    r_out = r * att[0][None, None, :].astype(r.dtype)
    d_out = d * att[1][None, None, :].astype(r.dtype)

    r_out_ref[0] = r_out.astype(r_out_ref.dtype)
    d_out_ref[0] = d_out.astype(d_out_ref.dtype)
    # Two half-writes (no concat temp).  For C % 128 == 0 (module default
    # C=128) both halves are lane-aligned dense stores.
    fuse_ref[0, :, :, 0:C] = (r_out * d_out).astype(fuse_ref.dtype)
    fuse_ref[0, :, :, C:2 * C] = (r_out + d_out).astype(fuse_ref.dtype)


def _build_conv_operand(conv_w, W):
    """Stacked banded-Toeplitz operand for the 7x7 conv (padding=3, no bias).

    conv[i, j] = sum_ki shifted_ki[i, :] @ A_ki[:, j]
      shifted_ki[i, j'] = m[i + ki - 3, j'] (0 outside) -- done in-kernel
      A_ki[j', j]       = conv_w[ki, j' - j + 3] if 0 <= j' - j + 3 <= 6 else 0
    Returned stacked along the contraction: (7W, W).
    """
    conv_w = conv_w.astype(jnp.float32)
    jc = jnp.arange(W)
    off = jc[:, None] - jc[None, :] + 3                        # j' - j + 3
    valid = (off >= 0) & (off <= 6)
    amat = jnp.where(valid[None, :, :],
                     conv_w[:, jnp.clip(off, 0, 6)], 0.0)      # (7, W, W)
    return amat.reshape(7 * W, W)


@jax.jit
def cfem_left(r, d, conv_w, r_w1, r_w2, d_w1, d_w2):
    """CFEM_Left forward.  r, d: NHWC (B, H, W, C).

    conv_w: (7, 7) spatial-attention weight (squeezed from (1,1,7,7)).
    r_w1/d_w1: (C//16, C) fc1 weights; r_w2/d_w2: (C, C//16) fc2 weights
    (squeezed 1x1-conv weights, bias-free as in the PyTorch module).
    """
    assert r.shape == d.shape, "rgb and depth should have same size"
    B, H, W, C = r.shape
    assert C >= 16 and C % 16 == 0, "in_channel must be a multiple of 16"
    C16 = C // 16

    a_stack = _build_conv_operand(conv_w, W)       # (7W, W) f32
    w1_s = jnp.stack([r_w1, d_w1], axis=0)         # (2, C16, C)
    w2_s = jnp.stack([r_w2, d_w2], axis=0)         # (2, C, C16)

    out_shapes = (
        jax.ShapeDtypeStruct((B, H, W, C), r.dtype),
        jax.ShapeDtypeStruct((B, H, W, C), r.dtype),
        jax.ShapeDtypeStruct((B, H, W, 2 * C), r.dtype),
    )

    grid_spec = pltpu.PrefetchScalarGridSpec(
        num_scalar_prefetch=0,
        grid=(B,),
        in_specs=[
            pl.BlockSpec((1, H, W, C), lambda b: (b, 0, 0, 0)),    # r
            pl.BlockSpec((1, H, W, C), lambda b: (b, 0, 0, 0)),    # d
            pl.BlockSpec((7 * W, W), lambda b: (0, 0)),            # stacked Toeplitz
            pl.BlockSpec((2, C16, C), lambda b: (0, 0, 0)),        # fc1 weights (r, d)
            pl.BlockSpec((2, C, C16), lambda b: (0, 0, 0)),        # fc2 weights (r, d)
        ],
        out_specs=[
            pl.BlockSpec((1, H, W, C), lambda b: (b, 0, 0, 0)),
            pl.BlockSpec((1, H, W, C), lambda b: (b, 0, 0, 0)),
            pl.BlockSpec((1, H, W, 2 * C), lambda b: (b, 0, 0, 0)),
        ],
    )

    # Explicit, generation-aware VMEM budget: double-buffered I/O blocks
    # (2C in, 4C out per pixel) + resident constants + in-kernel temporaries,
    # clamped below the queried physical VMEM capacity (minus headroom).
    elt = r.dtype.itemsize
    io_bytes = 2 * (2 + 4) * H * W * C * elt
    const_bytes = 2 * 4 * (7 * W * W + 4 * C16 * C)
    tmp_bytes = 4 * H * W * C * elt + 16 * H * W * 4
    need = io_bytes + const_bytes + tmp_bytes + (2 << 20)
    try:
        cap = int(getattr(pltpu.get_tpu_info(), "vmem_capacity_bytes",
                          64 * 1024 * 1024))
    except Exception:
        cap = 64 * 1024 * 1024
    vmem_limit = int(min(max(need, 32 << 20), cap - (8 << 20)))

    return pl.pallas_call(
        _cfem_left_kernel,
        out_shape=out_shapes,
        grid_spec=grid_spec,
        compiler_params=pltpu.CompilerParams(
            dimension_semantics=("parallel",),
            vmem_limit_bytes=vmem_limit),
    )(r, d, a_stack, w1_s, w2_s)


def cfem_left_nchw(r_nchw, d_nchw, conv_w, r_w1, r_w2, d_w1, d_w2):
    """PyTorch-layout convenience shim.  Prefer the NHWC entry point: these
    transposes roughly double HBM traffic for this memory-bound op."""
    to_nhwc = lambda x: jnp.transpose(x, (0, 2, 3, 1))
    to_nchw = lambda x: jnp.transpose(x, (0, 3, 1, 2))
    r_out, d_out, fuse = cfem_left(to_nhwc(r_nchw), to_nhwc(d_nchw),
                                   conv_w, r_w1, r_w2, d_w1, d_w2)
    return to_nchw(r_out), to_nchw(d_out), to_nchw(fuse)


# ------------------------- pure-JAX reference (NHWC) ------------------------
def cfem_left_ref_nhwc(r, d, conv_w, r_w1, r_w2, d_w1, d_w2):
    B, H, W, C = r.shape
    mul_fuse = r * d
    m = jnp.max(mul_fuse, axis=-1)                       # (B, H, W)
    pad = jnp.pad(m, ((0, 0), (3, 3), (3, 3)))
    conv = sum(conv_w[ki, kj] * pad[:, ki:ki + H, kj:kj + W]
               for ki in range(7) for kj in range(7))
    sa = jax.nn.sigmoid(conv)[..., None]
    r_f, d_f = r * sa, d * sa

    def ca(x, w1, w2):
        pooled = jnp.max(x, axis=(1, 2))                               # (B, C)
        hidden = jnp.maximum(
            jnp.sum(w1[None] * pooled[:, None, :], axis=-1), 0.0)      # (B, C//16)
        return jax.nn.sigmoid(
            jnp.sum(w2[None] * hidden[:, None, :], axis=-1))           # (B, C)

    r_out = r * ca(r_f, r_w1, r_w2)[:, None, None, :]
    d_out = d * ca(d_f, d_w1, d_w2)[:, None, None, :]
    fuse = jnp.concatenate([r_out * d_out, r_out + d_out], axis=-1)
    return r_out, d_out, fuse


if __name__ == "__main__":
    # small-but-valid shapes: in_channel must be >= 16 (the hardcoded //16)
    B, H, W, C = 2, 16, 16, 32
    C16 = C // 16

    key = jax.random.PRNGKey(0)
    k_r, k_d, k_c, k_rw1, k_rw2, k_dw1, k_dw2 = jax.random.split(key, 7)

    r = jax.random.normal(k_r, (B, H, W, C), jnp.float32)     # NHWC inputs
    d = jax.random.normal(k_d, (B, H, W, C), jnp.float32)

    # deterministic synthetic parameters (PyTorch weight shapes, squeezed of
    # their trivial 1x1 / singleton-channel dims; all convs are bias-free,
    # matching the module)
    conv_w = 0.05 * jax.random.normal(k_c, (7, 7), jnp.float32)        # (1,1,7,7) -> (7,7)
    r_w1 = 0.1 * jax.random.normal(k_rw1, (C16, C), jnp.float32)       # fc1 (C//16, C, 1, 1)
    r_w2 = 0.1 * jax.random.normal(k_rw2, (C, C16), jnp.float32)       # fc2 (C, C//16, 1, 1)
    d_w1 = 0.1 * jax.random.normal(k_dw1, (C16, C), jnp.float32)
    d_w2 = 0.1 * jax.random.normal(k_dw2, (C, C16), jnp.float32)

    r_out, d_out, fuse = cfem_left(r, d, conv_w, r_w1, r_w2, d_w1, d_w2)
    jax.block_until_ready((r_out, d_out, fuse))

    # correctness check against a pure-JAX reference
    ro_ref, do_ref, fu_ref = cfem_left_ref_nhwc(r, d, conv_w, r_w1, r_w2, d_w1, d_w2)
    np.testing.assert_allclose(np.asarray(r_out), np.asarray(ro_ref),
                               rtol=1e-3, atol=1e-3)
    np.testing.assert_allclose(np.asarray(d_out), np.asarray(do_ref),
                               rtol=1e-3, atol=1e-3)
    np.testing.assert_allclose(np.asarray(fuse), np.asarray(fu_ref),
                               rtol=1e-3, atol=1e-3)

    assert r_out.shape == (B, H, W, C)
    assert d_out.shape == (B, H, W, C)
    assert fuse.shape == (B, H, W, 2 * C)
    print("KERNEL_OK")
</pallas_src>

<mosaic_0001>
module attributes {stable_mosaic.version = 11 : i64} {
  func.func @_cfem_left_kernel(%arg0: i32, %arg1: memref<1x16x16x32xf32, #tpu.memory_space<vmem>>, %arg2: memref<1x16x16x32xf32, #tpu.memory_space<vmem>>, %arg3: memref<112x16xf32, #tpu.memory_space<vmem>>, %arg4: memref<2x2x32xf32, #tpu.memory_space<vmem>>, %arg5: memref<2x32x2xf32, #tpu.memory_space<vmem>>, %arg6: memref<1x16x16x32xf32, #tpu.memory_space<vmem>>, %arg7: memref<1x16x16x32xf32, #tpu.memory_space<vmem>>, %arg8: memref<1x16x16x64xf32, #tpu.memory_space<vmem>>) attributes {dimension_semantics = [#tpu.dimension_semantics<parallel>], iteration_bounds = array<i64: 2>, scalar_prefetch = 0 : i64, scratch_operands = 0 : i64, tpu.core_type = #tpu.core_type<tc>, window_params = [{transform_indices = @transform_0, window_bounds = array<i64: 1, 16, 16, 32>}, {transform_indices = @transform_1, window_bounds = array<i64: 1, 16, 16, 32>}, {pipeline_mode = #tpu.pipeline_mode<synchronous>, transform_indices = @transform_2, window_bounds = array<i64: 112, 16>}, {pipeline_mode = #tpu.pipeline_mode<synchronous>, transform_indices = @transform_3, window_bounds = array<i64: 2, 2, 32>}, {pipeline_mode = #tpu.pipeline_mode<synchronous>, transform_indices = @transform_4, window_bounds = array<i64: 2, 32, 2>}, {transform_indices = @transform_5, window_bounds = array<i64: 1, 16, 16, 32>}, {transform_indices = @transform_6, window_bounds = array<i64: 1, 16, 16, 32>}, {transform_indices = @transform_7, window_bounds = array<i64: 1, 16, 16, 64>}]} {
    %c0 = arith.constant 0 : index
    %c0_0 = arith.constant 0 : index
    %c0_1 = arith.constant 0 : index
    %c0_2 = arith.constant 0 : index
    %0 = vector.load %arg1[%c0, %c0_0, %c0_1, %c0_2] : memref<1x16x16x32xf32, #tpu.memory_space<vmem>>, vector<1x16x16x32xf32>
    %1 = vector.shape_cast %0 : vector<1x16x16x32xf32> to vector<16x16x32xf32>
    %c0_3 = arith.constant 0 : index
    %c0_4 = arith.constant 0 : index
    %c0_5 = arith.constant 0 : index
    %c0_6 = arith.constant 0 : index
    %2 = vector.load %arg2[%c0_3, %c0_4, %c0_5, %c0_6] : memref<1x16x16x32xf32, #tpu.memory_space<vmem>>, vector<1x16x16x32xf32>
    %3 = vector.shape_cast %2 : vector<1x16x16x32xf32> to vector<16x16x32xf32>
    %4 = arith.mulf %1, %3 : vector<16x16x32xf32>
    %cst = arith.constant dense<0xFF800000> : vector<16x16xf32>
    %5 = vector.multi_reduction <maximumf>, %4, %cst [2] : vector<16x16x32xf32> to vector<16x16xf32>
    %6 = tpu.iota {dimensions = array<i32: 0>} : vector<16x16xi32>
    %c3_i32 = arith.constant 3 : i32
    %7 = tpu.dynamic_rotate %5 by %c3_i32 dim 0 : vector<16x16xf32>, i32 -> vector<16x16xf32>
    %c-3_i32 = arith.constant -3 : i32
    %8 = vector.broadcast %c-3_i32 : i32 to vector<16x16xi32>
    %9 = arith.addi %6, %8 : vector<16x16xi32>
    %c0_i32 = arith.constant 0 : i32
    %10 = vector.broadcast %c0_i32 : i32 to vector<16x16xi32>
    %11 = arith.cmpi sge, %9, %10 : vector<16x16xi32>
    %c-3_i32_7 = arith.constant -3 : i32
    %12 = vector.broadcast %c-3_i32_7 : i32 to vector<16x16xi32>
    %13 = arith.addi %6, %12 : vector<16x16xi32>
    %c16_i32 = arith.constant 16 : i32
    %14 = vector.broadcast %c16_i32 : i32 to vector<16x16xi32>
    %15 = arith.cmpi slt, %13, %14 : vector<16x16xi32>
    %16 = arith.andi %11, %15 : vector<16x16xi1>
    %cst_8 = arith.constant 0.000000e+00 : f32
    %17 = vector.broadcast %cst_8 : f32 to vector<16x16xf32>
    %18 = arith.select %16, %7, %17 : vector<16x16xi1>, vector<16x16xf32>
    %c2_i32 = arith.constant 2 : i32
    %19 = tpu.dynamic_rotate %5 by %c2_i32 dim 0 : vector<16x16xf32>, i32 -> vector<16x16xf32>
    %c-2_i32 = arith.constant -2 : i32
    %20 = vector.broadcast %c-2_i32 : i32 to vector<16x16xi32>
    %21 = arith.addi %6, %20 : vector<16x16xi32>
    %c0_i32_9 = arith.constant 0 : i32
    %22 = vector.broadcast %c0_i32_9 : i32 to vector<16x16xi32>
    %23 = arith.cmpi sge, %21, %22 : vector<16x16xi32>
    %c-2_i32_10 = arith.constant -2 : i32
    %24 = vector.broadcast %c-2_i32_10 : i32 to vector<16x16xi32>
    %25 = arith.addi %6, %24 : vector<16x16xi32>
    %c16_i32_11 = arith.constant 16 : i32
    %26 = vector.broadcast %c16_i32_11 : i32 to vector<16x16xi32>
    %27 = arith.cmpi slt, %25, %26 : vector<16x16xi32>
    %28 = arith.andi %23, %27 : vector<16x16xi1>
    %cst_12 = arith.constant 0.000000e+00 : f32
    %29 = vector.broadcast %cst_12 : f32 to vector<16x16xf32>
    %30 = arith.select %28, %19, %29 : vector<16x16xi1>, vector<16x16xf32>
    %c1_i32 = arith.constant 1 : i32
    %31 = tpu.dynamic_rotate %5 by %c1_i32 dim 0 : vector<16x16xf32>, i32 -> vector<16x16xf32>
    %c-1_i32 = arith.constant -1 : i32
    %32 = vector.broadcast %c-1_i32 : i32 to vector<16x16xi32>
    %33 = arith.addi %6, %32 : vector<16x16xi32>
    %c0_i32_13 = arith.constant 0 : i32
    %34 = vector.broadcast %c0_i32_13 : i32 to vector<16x16xi32>
    %35 = arith.cmpi sge, %33, %34 : vector<16x16xi32>
    %c-1_i32_14 = arith.constant -1 : i32
    %36 = vector.broadcast %c-1_i32_14 : i32 to vector<16x16xi32>
    %37 = arith.addi %6, %36 : vector<16x16xi32>
    %c16_i32_15 = arith.constant 16 : i32
    %38 = vector.broadcast %c16_i32_15 : i32 to vector<16x16xi32>
    %39 = arith.cmpi slt, %37, %38 : vector<16x16xi32>
    %40 = arith.andi %35, %39 : vector<16x16xi1>
    %cst_16 = arith.constant 0.000000e+00 : f32
    %41 = vector.broadcast %cst_16 : f32 to vector<16x16xf32>
    %42 = arith.select %40, %31, %41 : vector<16x16xi1>, vector<16x16xf32>
    %c0_i32_17 = arith.constant 0 : i32
    %43 = vector.broadcast %c0_i32_17 : i32 to vector<16x16xi32>
    %44 = arith.addi %6, %43 : vector<16x16xi32>
    %c0_i32_18 = arith.constant 0 : i32
    %45 = vector.broadcast %c0_i32_18 : i32 to vector<16x16xi32>
    %46 = arith.cmpi sge, %44, %45 : vector<16x16xi32>
    %c0_i32_19 = arith.constant 0 : i32
    %47 = vector.broadcast %c0_i32_19 : i32 to vector<16x16xi32>
    %48 = arith.addi %6, %47 : vector<16x16xi32>
    %c16_i32_20 = arith.constant 16 : i32
    %49 = vector.broadcast %c16_i32_20 : i32 to vector<16x16xi32>
    %50 = arith.cmpi slt, %48, %49 : vector<16x16xi32>
    %51 = arith.andi %46, %50 : vector<16x16xi1>
    %cst_21 = arith.constant 0.000000e+00 : f32
    %52 = vector.broadcast %cst_21 : f32 to vector<16x16xf32>
    %53 = arith.select %51, %5, %52 : vector<16x16xi1>, vector<16x16xf32>
    %c15_i32 = arith.constant 15 : i32
    %54 = tpu.dynamic_rotate %5 by %c15_i32 dim 0 : vector<16x16xf32>, i32 -> vector<16x16xf32>
    %c1_i32_22 = arith.constant 1 : i32
    %55 = vector.broadcast %c1_i32_22 : i32 to vector<16x16xi32>
    %56 = arith.addi %6, %55 : vector<16x16xi32>
    %c0_i32_23 = arith.constant 0 : i32
    %57 = vector.broadcast %c0_i32_23 : i32 to vector<16x16xi32>
    %58 = arith.cmpi sge, %56, %57 : vector<16x16xi32>
    %c1_i32_24 = arith.constant 1 : i32
    %59 = vector.broadcast %c1_i32_24 : i32 to vector<16x16xi32>
    %60 = arith.addi %6, %59 : vector<16x16xi32>
    %c16_i32_25 = arith.constant 16 : i32
    %61 = vector.broadcast %c16_i32_25 : i32 to vector<16x16xi32>
    %62 = arith.cmpi slt, %60, %61 : vector<16x16xi32>
    %63 = arith.andi %58, %62 : vector<16x16xi1>
    %cst_26 = arith.constant 0.000000e+00 : f32
    %64 = vector.broadcast %cst_26 : f32 to vector<16x16xf32>
    %65 = arith.select %63, %54, %64 : vector<16x16xi1>, vector<16x16xf32>
    %c14_i32 = arith.constant 14 : i32
    %66 = tpu.dynamic_rotate %5 by %c14_i32 dim 0 : vector<16x16xf32>, i32 -> vector<16x16xf32>
    %c2_i32_27 = arith.constant 2 : i32
    %67 = vector.broadcast %c2_i32_27 : i32 to vector<16x16xi32>
    %68 = arith.addi %6, %67 : vector<16x16xi32>
    %c0_i32_28 = arith.constant 0 : i32
    %69 = vector.broadcast %c0_i32_28 : i32 to vector<16x16xi32>
    %70 = arith.cmpi sge, %68, %69 : vector<16x16xi32>
    %c2_i32_29 = arith.constant 2 : i32
    %71 = vector.broadcast %c2_i32_29 : i32 to vector<16x16xi32>
    %72 = arith.addi %6, %71 : vector<16x16xi32>
    %c16_i32_30 = arith.constant 16 : i32
    %73 = vector.broadcast %c16_i32_30 : i32 to vector<16x16xi32>
    %74 = arith.cmpi slt, %72, %73 : vector<16x16xi32>
    %75 = arith.andi %70, %74 : vector<16x16xi1>
    %cst_31 = arith.constant 0.000000e+00 : f32
    %76 = vector.broadcast %cst_31 : f32 to vector<16x16xf32>
    %77 = arith.select %75, %66, %76 : vector<16x16xi1>, vector<16x16xf32>
    %c13_i32 = arith.constant 13 : i32
    %78 = tpu.dynamic_rotate %5 by %c13_i32 dim 0 : vector<16x16xf32>, i32 -> vector<16x16xf32>
    %c3_i32_32 = arith.constant 3 : i32
    %79 = vector.broadcast %c3_i32_32 : i32 to vector<16x16xi32>
    %80 = arith.addi %6, %79 : vector<16x16xi32>
    %c0_i32_33 = arith.constant 0 : i32
    %81 = vector.broadcast %c0_i32_33 : i32 to vector<16x16xi32>
    %82 = arith.cmpi sge, %80, %81 : vector<16x16xi32>
    %c3_i32_34 = arith.constant 3 : i32
    %83 = vector.broadcast %c3_i32_34 : i32 to vector<16x16xi32>
    %84 = arith.addi %6, %83 : vector<16x16xi32>
    %c16_i32_35 = arith.constant 16 : i32
    %85 = vector.broadcast %c16_i32_35 : i32 to vector<16x16xi32>
    %86 = arith.cmpi slt, %84, %85 : vector<16x16xi32>
    %87 = arith.andi %82, %86 : vector<16x16xi1>
    %cst_36 = arith.constant 0.000000e+00 : f32
    %88 = vector.broadcast %cst_36 : f32 to vector<16x16xf32>
    %89 = arith.select %87, %78, %88 : vector<16x16xi1>, vector<16x16xf32>
    %90 = tpu.concatenate %18, %30, %42, %53, %65, %77, %89 in 1 : vector<16x16xf32>, vector<16x16xf32>, vector<16x16xf32>, vector<16x16xf32>, vector<16x16xf32>, vector<16x16xf32>, vector<16x16xf32> -> vector<16x112xf32>
    %c0_37 = arith.constant 0 : index
    %c0_38 = arith.constant 0 : index
    %91 = vector.load %arg3[%c0_37, %c0_38] : memref<112x16xf32, #tpu.memory_space<vmem>>, vector<112x16xf32>
    %cst_39 = arith.constant dense<0.000000e+00> : vector<16x16xf32>
    %92 = tpu.matmul %90, %91, %cst_39 {dimension_numbers = #tpu.dot_dimension_numbers<[1], [0], [0], [1], [0, 0, 1, 1], [], []>} : vector<16x112xf32>, vector<112x16xf32>, vector<16x16xf32> -> vector<16x16xf32>
    %93 = arith.negf %92 : vector<16x16xf32>
    %94 = math.exp %93 : vector<16x16xf32>
    %cst_40 = arith.constant 1.000000e+00 : f32
    %95 = vector.broadcast %cst_40 : f32 to vector<16x16xf32>
    %96 = arith.addf %95, %94 : vector<16x16xf32>
    %97 = arith.divf %95, %96 : vector<16x16xf32>
    %98 = vector.shape_cast %97 : vector<16x16xf32> to vector<16x16x1xf32>
    %99 = vector.shape_cast %98 : vector<16x16x1xf32> to vector<16x16x1xf32>
    %100 = vector.broadcast %99 : vector<16x16x1xf32> to vector<16x16x32xf32>
    %101 = arith.mulf %1, %100 : vector<16x16x32xf32>
    %102 = vector.shape_cast %101 : vector<16x16x32xf32> to vector<256x32xf32>
    %cst_41 = arith.constant dense<0xFF800000> : vector<32xf32>
    %103 = vector.multi_reduction <maximumf>, %102, %cst_41 [0] : vector<256x32xf32> to vector<32xf32>
    %104 = arith.mulf %3, %100 : vector<16x16x32xf32>
    %105 = vector.shape_cast %104 : vector<16x16x32xf32> to vector<256x32xf32>
    %cst_42 = arith.constant dense<0xFF800000> : vector<32xf32>
    %106 = vector.multi_reduction <maximumf>, %105, %cst_42 [0] : vector<256x32xf32> to vector<32xf32>
    %107 = vector.shape_cast %103 : vector<32xf32> to vector<1x32xf32>
    %108 = vector.shape_cast %106 : vector<32xf32> to vector<1x32xf32>
    %109 = tpu.concatenate %107, %108 in 0 : vector<1x32xf32>, vector<1x32xf32> -> vector<2x32xf32>
    %c0_43 = arith.constant 0 : index
    %c0_44 = arith.constant 0 : index
    %c0_45 = arith.constant 0 : index
    %110 = vector.load %arg4[%c0_43, %c0_44, %c0_45] : memref<2x2x32xf32, #tpu.memory_space<vmem>>, vector<2x2x32xf32>
    %c0_46 = arith.constant 0 : index
    %c0_47 = arith.constant 0 : index
    %c0_48 = arith.constant 0 : index
    %111 = vector.load %arg5[%c0_46, %c0_47, %c0_48] : memref<2x32x2xf32, #tpu.memory_space<vmem>>, vector<2x32x2xf32>
    %112 = vector.shape_cast %109 : vector<2x32xf32> to vector<2x1x32xf32>
    %113 = vector.broadcast %112 : vector<2x1x32xf32> to vector<2x2x32xf32>
    %114 = arith.mulf %110, %113 : vector<2x2x32xf32>
    %cst_49 = arith.constant dense<0.000000e+00> : vector<2x2xf32>
    %115 = vector.multi_reduction <add>, %114, %cst_49 [2] : vector<2x2x32xf32> to vector<2x2xf32>
    %cst_50 = arith.constant 0.000000e+00 : f32
    %116 = vector.broadcast %cst_50 : f32 to vector<2x2xf32>
    %117 = arith.maximumf %115, %116 : vector<2x2xf32>
    %118 = vector.shape_cast %117 : vector<2x2xf32> to vector<2x1x2xf32>
    %119 = vector.broadcast %118 : vector<2x1x2xf32> to vector<2x32x2xf32>
    %120 = arith.mulf %111, %119 : vector<2x32x2xf32>
    %cst_51 = arith.constant dense<0.000000e+00> : vector<2x32xf32>
    %121 = vector.multi_reduction <add>, %120, %cst_51 [2] : vector<2x32x2xf32> to vector<2x32xf32>
    %122 = arith.negf %121 : vector<2x32xf32>
    %123 = math.exp %122 : vector<2x32xf32>
    %cst_52 = arith.constant 1.000000e+00 : f32
    %124 = vector.broadcast %cst_52 : f32 to vector<2x32xf32>
    %125 = arith.addf %124, %123 : vector<2x32xf32>
    %126 = arith.divf %124, %125 : vector<2x32xf32>
    %127 = vector.extract_strided_slice %126 {offsets = [0, 0], sizes = [1, 32], strides = [1, 1]} : vector<2x32xf32> to vector<1x32xf32>
    %128 = vector.shape_cast %127 : vector<1x32xf32> to vector<32xf32>
    %129 = vector.shape_cast %128 : vector<32xf32> to vector<1x1x32xf32>
    %130 = vector.broadcast %129 : vector<1x1x32xf32> to vector<16x16x32xf32>
    %131 = arith.mulf %1, %130 : vector<16x16x32xf32>
    %132 = vector.extract_strided_slice %126 {offsets = [1, 0], sizes = [1, 32], strides = [1, 1]} : vector<2x32xf32> to vector<1x32xf32>
    %133 = vector.shape_cast %132 : vector<1x32xf32> to vector<32xf32>
    %134 = vector.shape_cast %133 : vector<32xf32> to vector<1x1x32xf32>
    %135 = vector.broadcast %134 : vector<1x1x32xf32> to vector<16x16x32xf32>
    %136 = arith.mulf %3, %135 : vector<16x16x32xf32>
    %c0_53 = arith.constant 0 : index
    %c0_54 = arith.constant 0 : index
    %c0_55 = arith.constant 0 : index
    %c0_56 = arith.constant 0 : index
    %137 = vector.load %arg6[%c0_53, %c0_54, %c0_55, %c0_56] : memref<1x16x16x32xf32, #tpu.memory_space<vmem>>, vector<1x16x16x32xf32>
    %138 = vector.shape_cast %137 : vector<1x16x16x32xf32> to vector<16x16x32xf32>
    %139 = vector.shape_cast %131 : vector<16x16x32xf32> to vector<1x16x16x32xf32>
    tpu.vector_store %arg6[%c0_53, %c0_54, %c0_55, %c0_56], %139 {strides = array<i32>} : memref<1x16x16x32xf32, #tpu.memory_space<vmem>>, vector<1x16x16x32xf32>,
    %c0_57 = arith.constant 0 : index
    %c0_58 = arith.constant 0 : index
    %c0_59 = arith.constant 0 : index
    %c0_60 = arith.constant 0 : index
    %140 = vector.load %arg7[%c0_57, %c0_58, %c0_59, %c0_60] : memref<1x16x16x32xf32, #tpu.memory_space<vmem>>, vector<1x16x16x32xf32>
    %141 = vector.shape_cast %140 : vector<1x16x16x32xf32> to vector<16x16x32xf32>
    %142 = vector.shape_cast %136 : vector<16x16x32xf32> to vector<1x16x16x32xf32>
    tpu.vector_store %arg7[%c0_57, %c0_58, %c0_59, %c0_60], %142 {strides = array<i32>} : memref<1x16x16x32xf32, #tpu.memory_space<vmem>>, vector<1x16x16x32xf32>,
    %143 = arith.mulf %131, %136 : vector<16x16x32xf32>
    %c0_61 = arith.constant 0 : index
    %c0_62 = arith.constant 0 : index
    %c0_63 = arith.constant 0 : index
    %c0_64 = arith.constant 0 : index
    %144 = vector.load %arg8[%c0_61, %c0_62, %c0_63, %c0_64] : memref<1x16x16x64xf32, #tpu.memory_space<vmem>>, vector<1x16x16x32xf32>
    %145 = vector.shape_cast %144 : vector<1x16x16x32xf32> to vector<16x16x32xf32>
    %146 = vector.shape_cast %143 : vector<16x16x32xf32> to vector<1x16x16x32xf32>
    tpu.vector_store %arg8[%c0_61, %c0_62, %c0_63, %c0_64], %146 {strides = array<i32>} : memref<1x16x16x64xf32, #tpu.memory_space<vmem>>, vector<1x16x16x32xf32>,
    %147 = arith.addf %131, %136 : vector<16x16x32xf32>
    %c0_65 = arith.constant 0 : index
    %c0_66 = arith.constant 0 : index
    %c0_67 = arith.constant 0 : index
    %c32 = arith.constant 32 : index
    %148 = vector.load %arg8[%c0_65, %c0_66, %c0_67, %c32] : memref<1x16x16x64xf32, #tpu.memory_space<vmem>>, vector<1x16x16x32xf32>
    %149 = vector.shape_cast %148 : vector<1x16x16x32xf32> to vector<16x16x32xf32>
    %150 = vector.shape_cast %147 : vector<16x16x32xf32> to vector<1x16x16x32xf32>
    tpu.vector_store %arg8[%c0_65, %c0_66, %c0_67, %c32], %150 {strides = array<i32>} : memref<1x16x16x64xf32, #tpu.memory_space<vmem>>, vector<1x16x16x32xf32>,
    return
  }
  func.func @transform_0(%arg0: i32) -> (i32, i32, i32, i32) {
    %c0_i32 = arith.constant 0 : i32
    %c0_i32_0 = arith.constant 0 : i32
    %c0_i32_1 = arith.constant 0 : i32
    %c0_i32_2 = arith.constant 0 : i32
    return %arg0, %c0_i32, %c0_i32_0, %c0_i32_1 : i32, i32, i32, i32
  }
  func.func @transform_1(%arg0: i32) -> (i32, i32, i32, i32) {
    %c0_i32 = arith.constant 0 : i32
    %c0_i32_0 = arith.constant 0 : i32
    %c0_i32_1 = arith.constant 0 : i32
    %c0_i32_2 = arith.constant 0 : i32
    return %arg0, %c0_i32, %c0_i32_0, %c0_i32_1 : i32, i32, i32, i32
  }
  func.func @transform_2(%arg0: i32) -> (i32, i32) {
    %c0_i32 = arith.constant 0 : i32
    %c0_i32_0 = arith.constant 0 : i32
    %c0_i32_1 = arith.constant 0 : i32
    return %c0_i32, %c0_i32_0 : i32, i32
  }
  func.func @transform_3(%arg0: i32) -> (i32, i32, i32) {
    %c0_i32 = arith.constant 0 : i32
    %c0_i32_0 = arith.constant 0 : i32
    %c0_i32_1 = arith.constant 0 : i32
    %c0_i32_2 = arith.constant 0 : i32
    return %c0_i32, %c0_i32_0, %c0_i32_1 : i32, i32, i32
  }
  func.func @transform_4(%arg0: i32) -> (i32, i32, i32) {
    %c0_i32 = arith.constant 0 : i32
    %c0_i32_0 = arith.constant 0 : i32
    %c0_i32_1 = arith.constant 0 : i32
    %c0_i32_2 = arith.constant 0 : i32
    return %c0_i32, %c0_i32_0, %c0_i32_1 : i32, i32, i32
  }
  func.func @transform_5(%arg0: i32) -> (i32, i32, i32, i32) {
    %c0_i32 = arith.constant 0 : i32
    %c0_i32_0 = arith.constant 0 : i32
    %c0_i32_1 = arith.constant 0 : i32
    %c0_i32_2 = arith.constant 0 : i32
    return %arg0, %c0_i32, %c0_i32_0, %c0_i32_1 : i32, i32, i32, i32
  }
  func.func @transform_6(%arg0: i32) -> (i32, i32, i32, i32) {
    %c0_i32 = arith.constant 0 : i32
    %c0_i32_0 = arith.constant 0 : i32
    %c0_i32_1 = arith.constant 0 : i32
    %c0_i32_2 = arith.constant 0 : i32
    return %arg0, %c0_i32, %c0_i32_0, %c0_i32_1 : i32, i32, i32, i32
  }
  func.func @transform_7(%arg0: i32) -> (i32, i32, i32, i32) {
    %c0_i32 = arith.constant 0 : i32
    %c0_i32_0 = arith.constant 0 : i32
    %c0_i32_1 = arith.constant 0 : i32
    %c0_i32_2 = arith.constant 0 : i32
    return %arg0, %c0_i32, %c0_i32_0, %c0_i32_1 : i32, i32, i32, i32
  }
}

</mosaic_0001>

<llo_original>
// kernel: cfem_left.1
$region0: #{cfem_left.1}
  #allocation0 [shape = 'u32[]', space=smem, size = 0x4, offset = 0x4, fixed_abs, tag = 'smem constant byte address 0x4 - core index']
  #allocation1 [shape = 'u32[72,128]{1,0:T(1,128)}', space=vmem, size = 0x9000, scoped, tag = 'internal scratch']
  %s0 = inlined_call_operand.vmem [shape: f32[2,16,16,32], index: 0, kind: input, shape index: {}]
  %s1 = inlined_call_operand.vmem [shape: f32[2,16,16,32], index: 1, kind: input, shape index: {}]
  %s2 = inlined_call_operand.vmem [shape: f32[112,16], index: 2, kind: input, shape index: {}]
  %s3 = inlined_call_operand.vmem [shape: f32[2,2,32], index: 3, kind: input, shape index: {}]
  %s4 = inlined_call_operand.vmem [shape: f32[2,32,2], index: 4, kind: input, shape index: {}]
  %s5 = inlined_call_operand.hbm [shape: f32[2,16,16,32], index: 5, kind: output, shape index: {0}]
  %s6 = inlined_call_operand.hbm [shape: f32[2,16,16,32], index: 6, kind: output, shape index: {1}]
  %s7 = inlined_call_operand.hbm [shape: f32[2,16,16,64], index: 7, kind: output, shape index: {2}]
  %8 = xla_tuple %s5, %s6, %s7
  %s9 = sld [smem:[#allocation0]]
  $region69: #{cfem_left.1} parent=0
    _
  %s11 = ssub.s32 1, %s9
  %s12 = scalar_select 0, %s11, %s9
  $region1: #{cfem_left.1} parent=0
    #allocation2 [shape = 'u8[262144]{0}', space=vmem, size = 0x40000, scoped, tag = 'output window, operand 0']
    #allocation3 [shape = 's32[2]{0}', space=sflag, size = 0x8, scoped, tag = 'scoped memory for cfem_left.1']
    #allocation4 [shape = 'u8[262144]{0}', space=vmem, size = 0x40000, scoped, tag = 'output window, operand 1']
    #allocation5 [shape = 's32[2]{0}', space=sflag, size = 0x8, scoped, tag = 'scoped memory for cfem_left.1']
    #allocation6 [shape = 'u8[262144]{0}', space=vmem, size = 0x40000, scoped, tag = 'output window, operand 2']
    %13 = vsyncpa [#allocation3], 0
    %s14 = scalar_lea.sflag [#allocation3], 1
    %15 = vsyncpa %s14, 0
    %16 = vsyncpa [#allocation5], 0
    %s17 = scalar_lea.sflag [#allocation5], 1
    %18 = vsyncpa %s17, 0
    loop: start=0, step=1, limit=4
    $region2: #{cfem_left.1} parent=1 // loop_pre_header
      _
    $region3: #{cfem_left.1} parent=1 // loop_header
      %s20 = sphi 0, %s24
      %p21 = scmp.ge.s32.totalorder %s20, 4
      %s30 = sphi 0, %s32
      %s33 = sphi 0, %s30
      %s34 = sphi 0, %s33
      %s50 = sphi 0, %s34
      %s56 = sphi 0, %s58
      %s59 = sphi 0, %s56
      %s60 = sphi 0, %s59
      %s76 = sphi 0, %s60
      %s80 = sphi 0, %s80
      %s82 = sphi 0, %s80
      %s83 = sphi 0, %s82
      %s97 = sphi 0, %s83
      %s101 = sphi 0, %s101
      %s103 = sphi 0, %s101
      %s104 = sphi 0, %s103
      %s118 = sphi 0, %s104
      %s122 = sphi 0, %s122
      %s124 = sphi 0, %s122
      %s125 = sphi 0, %s124
      %s139 = sphi 0, %s125
      %s145 = sphi 0, %s147
      %s148 = sphi 0, %s145
      %s149 = sphi 0, %s148
      %s165 = sphi 0, %s149
      %s171 = sphi 0, %s173
      %s174 = sphi 0, %s171
      %s175 = sphi 0, %s174
      %s191 = sphi 0, %s175
      %s197 = sphi 0, %s199
      %s200 = sphi 0, %s197
      %s201 = sphi 0, %s200
      %s217 = sphi 0, %s201
    $region4: #{cfem_left.1} parent=1 // loop_header_branch
      %23 = sbr.rel (%p21) target = $region8
    $region5: #{cfem_left.1} parent=1 // loop_body
      %s25 = ssub.s32 %s20, 1
      %s26 = ssub.s32 %s20, 2
      %s27 = sadd.s32 %s20, 1
      %s28 = ssub.s32 %s20, %s27
      %p29 = scmp.eq.s32.totalorder %s28, 0
      %s31 = sadd.s32 %s30, 1
      %s32 = scalar_select %p29, %s30, %s31
      %p35 = pneg %p29
      %p36 = scmp.eq.s32.totalorder %s20, 1
      %p37 = por %p35, %p36
      %p38 = scmp.ne.s32.totalorder %s30, %s33
      %p39 = scmp.eq.s32.totalorder %s20, 0
      %p40 = por %p38, %p39
      %p41 = scmp.ne.s32.totalorder %s30, %s33
      %p42 = scmp.eq.s32.totalorder %s25, 1
      %p43 = por %p41, %p42
      %p44 = scmp.ne.s32.totalorder %s33, %s34
      %p45 = scmp.eq.s32.totalorder %s25, 0
      %p46 = por %p44, %p45
      %p47 = scmp.ne.s32.totalorder %s33, %s34
      %p48 = scmp.eq.s32.totalorder %s26, 1
      %p49 = por %p47, %p48
      %p51 = scmp.ne.s32.totalorder %s34, %s50
      %p52 = scmp.eq.s32.totalorder %s26, 0
      %p53 = por %p51, %p52
      %s54 = ssub.s32 %s20, %s27
      %p55 = scmp.eq.s32.totalorder %s54, 0
      %s57 = sadd.s32 %s56, 1
      %s58 = scalar_select %p55, %s56, %s57
      %p61 = pneg %p55
      %p62 = scmp.eq.s32.totalorder %s20, 1
      %p63 = por %p61, %p62
      %p64 = scmp.ne.s32.totalorder %s56, %s59
      %p65 = scmp.eq.s32.totalorder %s20, 0
      %p66 = por %p64, %p65
      %p67 = scmp.ne.s32.totalorder %s56, %s59
      %p68 = scmp.eq.s32.totalorder %s25, 1
      %p69 = por %p67, %p68
      %p70 = scmp.ne.s32.totalorder %s59, %s60
      %p71 = scmp.eq.s32.totalorder %s25, 0
      %p72 = por %p70, %p71
      %p73 = scmp.ne.s32.totalorder %s59, %s60
      %p74 = scmp.eq.s32.totalorder %s26, 1
      %p75 = por %p73, %p74
      %p77 = scmp.ne.s32.totalorder %s60, %s76
      %p78 = scmp.eq.s32.totalorder %s26, 0
      %p79 = por %p77, %p78
      %s81 = sadd.s32 %s80, 1
      %p84 = scmp.eq.s32.totalorder %s20, 1
      %p85 = scmp.ne.s32.totalorder %s80, %s82
      %p86 = scmp.eq.s32.totalorder %s20, 0
      %p87 = por %p85, %p86
      %p88 = scmp.ne.s32.totalorder %s80, %s82
      %p89 = scmp.eq.s32.totalorder %s25, 1
      %p90 = por %p88, %p89
      %p91 = scmp.ne.s32.totalorder %s82, %s83
      %p92 = scmp.eq.s32.totalorder %s25, 0
      %p93 = por %p91, %p92
      %p94 = scmp.ne.s32.totalorder %s82, %s83
      %p95 = scmp.eq.s32.totalorder %s26, 1
      %p96 = por %p94, %p95
      %p98 = scmp.ne.s32.totalorder %s83, %s97
      %p99 = scmp.eq.s32.totalorder %s26, 0
      %p100 = por %p98, %p99
      %s102 = sadd.s32 %s101, 1
      %p105 = scmp.eq.s32.totalorder %s20, 1
      %p106 = scmp.ne.s32.totalorder %s101, %s103
      %p107 = scmp.eq.s32.totalorder %s20, 0
      %p108 = por %p106, %p107
      %p109 = scmp.ne.s32.totalorder %s101, %s103
      %p110 = scmp.eq.s32.totalorder %s25, 1
      %p111 = por %p109, %p110
      %p112 = scmp.ne.s32.totalorder %s103, %s104
      %p113 = scmp.eq.s32.totalorder %s25, 0
      %p114 = por %p112, %p113
      %p115 = scmp.ne.s32.totalorder %s103, %s104
      %p116 = scmp.eq.s32.totalorder %s26, 1
      %p117 = por %p115, %p116
      %p119 = scmp.ne.s32.totalorder %s104, %s118
      %p120 = scmp.eq.s32.totalorder %s26, 0
      %p121 = por %p119, %p120
      %s123 = sadd.s32 %s122, 1
      %p126 = scmp.eq.s32.totalorder %s20, 1
      %p127 = scmp.ne.s32.totalorder %s122, %s124
      %p128 = scmp.eq.s32.totalorder %s20, 0
      %p129 = por %p127, %p128
      %p130 = scmp.ne.s32.totalorder %s122, %s124
      %p131 = scmp.eq.s32.totalorder %s25, 1
      %p132 = por %p130, %p131
      %p133 = scmp.ne.s32.totalorder %s124, %s125
      %p134 = scmp.eq.s32.totalorder %s25, 0
      %p135 = por %p133, %p134
      %p136 = scmp.ne.s32.totalorder %s124, %s125
      %p137 = scmp.eq.s32.totalorder %s26, 1
      %p138 = por %p136, %p137
      %p140 = scmp.ne.s32.totalorder %s125, %s139
      %p141 = scmp.eq.s32.totalorder %s26, 0
      %p142 = por %p140, %p141
      %s143 = ssub.s32 %s20, %s27
      %p144 = scmp.eq.s32.totalorder %s143, 0
      %s146 = sadd.s32 %s145, 1
      %s147 = scalar_select %p144, %s145, %s146
      %p150 = pneg %p144
      %p151 = scmp.eq.s32.totalorder %s20, 1
      %p152 = por %p150, %p151
      %p153 = scmp.ne.s32.totalorder %s145, %s148
      %p154 = scmp.eq.s32.totalorder %s20, 0
      %p155 = por %p153, %p154
      %p156 = scmp.ne.s32.totalorder %s145, %s148
      %p157 = scmp.eq.s32.totalorder %s25, 1
      %p158 = por %p156, %p157
      %p159 = scmp.ne.s32.totalorder %s148, %s149
      %p160 = scmp.eq.s32.totalorder %s25, 0
      %p161 = por %p159, %p160
      %p162 = scmp.ne.s32.totalorder %s148, %s149
      %p163 = scmp.eq.s32.totalorder %s26, 1
      %p164 = por %p162, %p163
      %p166 = scmp.ne.s32.totalorder %s149, %s165
      %p167 = scmp.eq.s32.totalorder %s26, 0
      %p168 = por %p166, %p167
      %s169 = ssub.s32 %s20, %s27
      %p170 = scmp.eq.s32.totalorder %s169, 0
      %s172 = sadd.s32 %s171, 1
      %s173 = scalar_select %p170, %s171, %s172
      %p176 = pneg %p170
      %p177 = scmp.eq.s32.totalorder %s20, 1
      %p178 = por %p176, %p177
      %p179 = scmp.ne.s32.totalorder %s171, %s174
      %p180 = scmp.eq.s32.totalorder %s20, 0
      %p181 = por %p179, %p180
      %p182 = scmp.ne.s32.totalorder %s171, %s174
      %p183 = scmp.eq.s32.totalorder %s25, 1
      %p184 = por %p182, %p183
      %p185 = scmp.ne.s32.totalorder %s174, %s175
      %p186 = scmp.eq.s32.totalorder %s25, 0
      %p187 = por %p185, %p186
      %p188 = scmp.ne.s32.totalorder %s174, %s175
      %p189 = scmp.eq.s32.totalorder %s26, 1
      %p190 = por %p188, %p189
      %p192 = scmp.ne.s32.totalorder %s175, %s191
      %p193 = scmp.eq.s32.totalorder %s26, 0
      %p194 = por %p192, %p193
      %s195 = ssub.s32 %s20, %s27
      %p196 = scmp.eq.s32.totalorder %s195, 0
      %s198 = sadd.s32 %s197, 1
      %s199 = scalar_select %p196, %s197, %s198
      %p202 = pneg %p196
      %p203 = scmp.eq.s32.totalorder %s20, 1
      %p204 = por %p202, %p203
      %p205 = scmp.ne.s32.totalorder %s197, %s200
      %p206 = scmp.eq.s32.totalorder %s20, 0
      %p207 = por %p205, %p206
      %p208 = scmp.ne.s32.totalorder %s197, %s200
      %p209 = scmp.eq.s32.totalorder %s25, 1
      %p210 = por %p208, %p209
      %p211 = scmp.ne.s32.totalorder %s200, %s201
      %p212 = scmp.eq.s32.totalorder %s25, 0
      %p213 = por %p211, %p212
      %p214 = scmp.ne.s32.totalorder %s200, %s201
      %p215 = scmp.eq.s32.totalorder %s26, 1
      %p216 = por %p214, %p215
      %p218 = scmp.ne.s32.totalorder %s201, %s217
      %p219 = scmp.eq.s32.totalorder %s26, 0
      %p220 = por %p218, %p219
      %p221 = scmp.le.s32.totalorder 1, %s20
      %p222 = scmp.lt.s32.totalorder %s20, 3
      %p223 = pnand %p221, %p222
      %p224 = pneg %p223
      // Predicated region
      $region9: #{cfem_left.1} parent=5 // pred_check
        _
      $region10: #{cfem_left.1} parent=5 // pred_check_branch
        %226 = sbr.rel (%p223) target = $region12
      $region11: #{cfem_left.1} parent=5 // pred_region
        %s227 = ssub.s32 %s20, 1
        // Predicated region
        $region13: #{cfem_left.1} parent=11 // pred_check
          %p228 = pneg %p93
        $region14: #{cfem_left.1} parent=11 // pred_check_branch
          %230 = sbr.rel (%p228) target = $region16
        $region15: #{cfem_left.1} parent=11 // pred_region
          _
        $region16: #{cfem_left.1} parent=11 // pred_fallthru
          _
        // Predicated region
        $region17: #{cfem_left.1} parent=11 // pred_check
          %p231 = pneg %p114
        $region18: #{cfem_left.1} parent=11 // pred_check_branch
          %233 = sbr.rel (%p231) target = $region20
        $region19: #{cfem_left.1} parent=11 // pred_region
          _
        $region20: #{cfem_left.1} parent=11 // pred_fallthru
          _
        // Predicated region
        $region21: #{cfem_left.1} parent=11 // pred_check
          %p234 = pneg %p135
        $region22: #{cfem_left.1} parent=11 // pred_check_branch
          %236 = sbr.rel (%p234) target = $region24
        $region23: #{cfem_left.1} parent=11 // pred_region
          _
        $region24: #{cfem_left.1} parent=11 // pred_fallthru
          _
      $region12: #{cfem_left.1} parent=5 // pred_fallthru
        _
      %p237 = scmp.lt.s32.totalorder %s20, 2
      // Predicated region
      $region25: #{cfem_left.1} parent=5 // pred_check
        %p238 = pneg %p237
      $region26: #{cfem_left.1} parent=5 // pred_check_branch
        %240 = sbr.rel (%p238) target = $region28
      $region27: #{cfem_left.1} parent=5 // pred_region
        // Predicated region
        $region29: #{cfem_left.1} parent=27 // pred_check
          %p241 = pneg %p40
        $region30: #{cfem_left.1} parent=27 // pred_check_branch
          %243 = sbr.rel (%p241) target = $region32
        $region31: #{cfem_left.1} parent=27 // pred_region
          %p244 = scmp.lt.s32.totalorder %s20, 1
          %s245 = scalar_select %p244, %s20, 1
          %s246 = smul.addr %s245, 32
          %s247 = smul.addr %s246, 8
          %s248 = scalar_lea.vmem %s0, %s247
        $region32: #{cfem_left.1} parent=27 // pred_fallthru
          _
        // Predicated region
        $region33: #{cfem_left.1} parent=27 // pred_check
          %p249 = pneg %p66
        $region34: #{cfem_left.1} parent=27 // pred_check_branch
          %251 = sbr.rel (%p249) target = $region36
        $region35: #{cfem_left.1} parent=27 // pred_region
          %p252 = scmp.lt.s32.totalorder %s20, 1
          %s253 = scalar_select %p252, %s20, 1
          %s254 = smul.addr %s253, 32
          %s255 = smul.addr %s254, 8
          %s256 = scalar_lea.vmem %s1, %s255
        $region36: #{cfem_left.1} parent=27 // pred_fallthru
          _
      $region28: #{cfem_left.1} parent=5 // pred_fallthru
        _
      %p257 = scmp.le.s32.totalorder 1, %s20
      %p258 = scmp.lt.s32.totalorder %s20, 3
      %p259 = pnand %p257, %p258
      %p260 = pneg %p259
      // Predicated region
      $region37: #{cfem_left.1} parent=5 // pred_check
        _
      $region38: #{cfem_left.1} parent=5 // pred_check_branch
        %262 = sbr.rel (%p259) target = $region40
      $region39: #{cfem_left.1} parent=5 // pred_region
        %s263 = ssub.s32 %s20, 1
        %p264 = scmp.lt.s32.totalorder %s25, 1
        %s265 = scalar_select %p264, %s25, 1
        %s266 = smul.addr %s265, 32
        %s267 = smul.addr %s266, 8
        %s268 = scalar_lea.vmem %s0, %s267
        %p269 = pneg %p46
        %p270 = pneg %p43
        %p271 = scmp.lt.s32.totalorder %s25, 1
        %s272 = scalar_select %p271, %s25, 1
        %s273 = smul.addr %s272, 32
        %s274 = smul.addr %s273, 8
        %s275 = scalar_lea.vmem %s1, %s274
        %p276 = pneg %p72
        %p277 = pneg %p69
        %p278 = pneg %p93
        %p279 = pneg %p90
        %p280 = pneg %p114
        %p281 = pneg %p111
        %p282 = pneg %p135
        %p283 = pneg %p132
        %p284 = pneg %p161
        %p285 = pneg %p158
        %s286 = sand.u32 %s148, 1
        %s287 = scalar_lea.sflag [#allocation3], %s286
        %s288 = sand.u32 %s148, 1
        %s289 = smul.addr %s288, 256
        %s290 = scalar_lea.vmem [#allocation2], %s289
        %p291 = pneg %p187
        %p292 = pneg %p184
        %s293 = sand.u32 %s25, 1
        %s294 = scalar_lea.sflag [#allocation5], %s293
        %s295 = sand.u32 %s174, 1
        %s296 = smul.addr %s295, 256
        %s297 = scalar_lea.vmem [#allocation4], %s296
        %p298 = pneg %p213
        %p299 = pneg %p210
        %s300 = sand.u32 %s25, 1
        %s301 = scalar_lea.sflag [#allocation5], %s300
        %s302 = sand.u32 %s200, 1
        %s303 = smul.addr %s302, 256
        %s304 = scalar_lea.vmem [#allocation6], %s303
        %p305 = scmp.lt.s32.totalorder %s25, 1
        %s306 = scalar_select %p305, %s25, 1
        %s307 = smul.addr %s306, 32
        %s308 = smul.addr %s307, 8
        %s309 = scalar_lea.vmem %s0, %s308
        %p310 = scmp.lt.s32.totalorder %s25, 1
        %s311 = scalar_select %p310, %s25, 1
        %s312 = smul.addr %s311, 32
        %s313 = smul.addr %s312, 8
        %s314 = scalar_lea.vmem %s1, %s313
        %v315 = vld [vmem:[%s309] sm:$0xff]
        %v316 = vld [vmem:[%s309 + $0x8] sm:$0xff]
        %v317 = vld [vmem:[%s309 + $0x10] sm:$0xff]
        %v318 = vld [vmem:[%s309 + $0x18] sm:$0xff]
        %v319 = vld [vmem:[%s309 + $0x20] sm:$0xff]
        %v320 = vld [vmem:[%s309 + $0x28] sm:$0xff]
        %v321 = vld [vmem:[%s309 + $0x30] sm:$0xff]
        %v322 = vld [vmem:[%s309 + $0x38] sm:$0xff]
        %v323 = vld [vmem:[%s309 + $0x40] sm:$0xff]
        %v324 = vld [vmem:[%s309 + $0x48] sm:$0xff]
        %v325 = vld [vmem:[%s309 + $0x50] sm:$0xff]
        %v326 = vld [vmem:[%s309 + $0x58] sm:$0xff]
        %v327 = vld [vmem:[%s309 + $0x60] sm:$0xff]
        %v328 = vld [vmem:[%s309 + $0x68] sm:$0xff]
        %v329 = vld [vmem:[%s309 + $0x70] sm:$0xff]
        %v330 = vld [vmem:[%s309 + $0x78] sm:$0xff]
        %v331 = vld [vmem:[%s309 + $0x80] sm:$0xff]
        %v332 = vld [vmem:[%s309 + $0x88] sm:$0xff]
        %v333 = vld [vmem:[%s309 + $0x90] sm:$0xff]
        %v334 = vld [vmem:[%s309 + $0x98] sm:$0xff]
        %v335 = vld [vmem:[%s309 + $0xa0] sm:$0xff]
        %v336 = vld [vmem:[%s309 + $0xa8] sm:$0xff]
        %v337 = vld [vmem:[%s309 + $0xb0] sm:$0xff]
        %v338 = vld [vmem:[%s309 + $0xb8] sm:$0xff]
        %v339 = vld [vmem:[%s309 + $0xc0] sm:$0xff]
        %v340 = vld [vmem:[%s309 + $0xc8] sm:$0xff]
        %v341 = vld [vmem:[%s309 + $0xd0] sm:$0xff]
        %v342 = vld [vmem:[%s309 + $0xd8] sm:$0xff]
        %v343 = vld [vmem:[%s309 + $0xe0] sm:$0xff]
        %v344 = vld [vmem:[%s309 + $0xe8] sm:$0xff]
        %v345 = vld [vmem:[%s309 + $0xf0] sm:$0xff]
        %v346 = vld [vmem:[%s309 + $0xf8] sm:$0xff]
        %v347 = vld [vmem:[%s314] sm:$0xff]
        %v348 = vld [vmem:[%s314 + $0x8] sm:$0xff]
        %v349 = vld [vmem:[%s314 + $0x10] sm:$0xff]
        %v350 = vld [vmem:[%s314 + $0x18] sm:$0xff]
        %v351 = vld [vmem:[%s314 + $0x20] sm:$0xff]
        %v352 = vld [vmem:[%s314 + $0x28] sm:$0xff]
        %v353 = vld [vmem:[%s314 + $0x30] sm:$0xff]
        %v354 = vld [vmem:[%s314 + $0x38] sm:$0xff]
        %v355 = vld [vmem:[%s314 + $0x40] sm:$0xff]
        %v356 = vld [vmem:[%s314 + $0x48] sm:$0xff]
        %v357 = vld [vmem:[%s314 + $0x50] sm:$0xff]
        %v358 = vld [vmem:[%s314 + $0x58] sm:$0xff]
        %v359 = vld [vmem:[%s314 + $0x60] sm:$0xff]
        %v360 = vld [vmem:[%s314 + $0x68] sm:$0xff]
        %v361 = vld [vmem:[%s314 + $0x70] sm:$0xff]
        %v362 = vld [vmem:[%s314 + $0x78] sm:$0xff]
        %v363 = vld [vmem:[%s314 + $0x80] sm:$0xff]
        %v364 = vld [vmem:[%s314 + $0x88] sm:$0xff]
        %v365 = vld [vmem:[%s314 + $0x90] sm:$0xff]
        %v366 = vld [vmem:[%s314 + $0x98] sm:$0xff]
        %v367 = vld [vmem:[%s314 + $0xa0] sm:$0xff]
        %v368 = vld [vmem:[%s314 + $0xa8] sm:$0xff]
        %v369 = vld [vmem:[%s314 + $0xb0] sm:$0xff]
        %v370 = vld [vmem:[%s314 + $0xb8] sm:$0xff]
        %v371 = vld [vmem:[%s314 + $0xc0] sm:$0xff]
        %v372 = vld [vmem:[%s314 + $0xc8] sm:$0xff]
        %v373 = vld [vmem:[%s314 + $0xd0] sm:$0xff]
        %v374 = vld [vmem:[%s314 + $0xd8] sm:$0xff]
        %v375 = vld [vmem:[%s314 + $0xe0] sm:$0xff]
        %v376 = vld [vmem:[%s314 + $0xe8] sm:$0xff]
        %v377 = vld [vmem:[%s314 + $0xf0] sm:$0xff]
        %v378 = vld [vmem:[%s314 + $0xf8] sm:$0xff]
        %v379 = vmul.f32 %v315, %v347
        %v380 = vmul.f32 %v316, %v348
        %v381 = vmul.f32 %v317, %v349
        %v382 = vmul.f32 %v318, %v350
        %v383 = vmul.f32 %v319, %v351
        %v384 = vmul.f32 %v320, %v352
        %v385 = vmul.f32 %v321, %v353
        %v386 = vmul.f32 %v322, %v354
        %v387 = vmul.f32 %v323, %v355
        %v388 = vmul.f32 %v324, %v356
        %v389 = vmul.f32 %v325, %v357
        %v390 = vmul.f32 %v326, %v358
        %v391 = vmul.f32 %v327, %v359
        %v392 = vmul.f32 %v328, %v360
        %v393 = vmul.f32 %v329, %v361
        %v394 = vmul.f32 %v330, %v362
        %v395 = vmul.f32 %v331, %v363
        %v396 = vmul.f32 %v332, %v364
        %v397 = vmul.f32 %v333, %v365
        %v398 = vmul.f32 %v334, %v366
        %v399 = vmul.f32 %v335, %v367
        %v400 = vmul.f32 %v336, %v368
        %v401 = vmul.f32 %v337, %v369
        %v402 = vmul.f32 %v338, %v370
        %v403 = vmul.f32 %v339, %v371
        %v404 = vmul.f32 %v340, %v372
        %v405 = vmul.f32 %v341, %v373
        %v406 = vmul.f32 %v342, %v374
        %v407 = vmul.f32 %v343, %v375
        %v408 = vmul.f32 %v344, %v376
        %v409 = vmul.f32 %v345, %v377
        %v410 = vmul.f32 %v346, %v378
        %vm411 = vcmask 261120
        %v412 = vsel %vm411, %v379, -inf
        %413 = vmax.xlane.f32.xlu0 %v412
        %v414 = vpop.xlane.xlu0 %413
        %v415 = vsel %vm411, %v380, -inf
        %416 = vmax.xlane.f32.xlu0 %v415
        %v417 = vpop.xlane.xlu0 %416
        %v418 = vsel %vm411, %v381, -inf
        %419 = vmax.xlane.f32.xlu0 %v418
        %v420 = vpop.xlane.xlu0 %419
        %v421 = vsel %vm411, %v382, -inf
        %422 = vmax.xlane.f32.xlu0 %v421
        %v423 = vpop.xlane.xlu0 %422
        %v424 = vsel %vm411, %v383, -inf
        %425 = vmax.xlane.f32.xlu0 %v424
        %v426 = vpop.xlane.xlu0 %425
        %v427 = vsel %vm411, %v384, -inf
        %428 = vmax.xlane.f32.xlu0 %v427
        %v429 = vpop.xlane.xlu0 %428
        %v430 = vsel %vm411, %v385, -inf
        %431 = vmax.xlane.f32.xlu0 %v430
        %v432 = vpop.xlane.xlu0 %431
        %v433 = vsel %vm411, %v386, -inf
        %434 = vmax.xlane.f32.xlu0 %v433
        %v435 = vpop.xlane.xlu0 %434
        %v436 = vsel %vm411, %v387, -inf
        %437 = vmax.xlane.f32.xlu0 %v436
        %v438 = vpop.xlane.xlu0 %437
        %v439 = vsel %vm411, %v388, -inf
        %440 = vmax.xlane.f32.xlu0 %v439
        %v441 = vpop.xlane.xlu0 %440
        %v442 = vsel %vm411, %v389, -inf
        %443 = vmax.xlane.f32.xlu0 %v442
        %v444 = vpop.xlane.xlu0 %443
        %v445 = vsel %vm411, %v390, -inf
        %446 = vmax.xlane.f32.xlu0 %v445
        %v447 = vpop.xlane.xlu0 %446
        %v448 = vsel %vm411, %v391, -inf
        %449 = vmax.xlane.f32.xlu0 %v448
        %v450 = vpop.xlane.xlu0 %449
        %v451 = vsel %vm411, %v392, -inf
        %452 = vmax.xlane.f32.xlu0 %v451
        %v453 = vpop.xlane.xlu0 %452
        %v454 = vsel %vm411, %v393, -inf
        %455 = vmax.xlane.f32.xlu0 %v454
        %v456 = vpop.xlane.xlu0 %455
        %v457 = vsel %vm411, %v394, -inf
        %458 = vmax.xlane.f32.xlu0 %v457
        %v459 = vpop.xlane.xlu0 %458
        %v460 = vsel %vm411, %v395, -inf
        %461 = vmax.xlane.f32.xlu0 %v460
        %v462 = vpop.xlane.xlu0 %461
        %v463 = vsel %vm411, %v396, -inf
        %464 = vmax.xlane.f32.xlu0 %v463
        %v465 = vpop.xlane.xlu0 %464
        %v466 = vsel %vm411, %v397, -inf
        %467 = vmax.xlane.f32.xlu0 %v466
        %v468 = vpop.xlane.xlu0 %467
        %v469 = vsel %vm411, %v398, -inf
        %470 = vmax.xlane.f32.xlu0 %v469
        %v471 = vpop.xlane.xlu0 %470
        %v472 = vsel %vm411, %v399, -inf
        %473 = vmax.xlane.f32.xlu0 %v472
        %v474 = vpop.xlane.xlu0 %473
        %v475 = vsel %vm411, %v400, -inf
        %476 = vmax.xlane.f32.xlu0 %v475
        %v477 = vpop.xlane.xlu0 %476
        %v478 = vsel %vm411, %v401, -inf
        %479 = vmax.xlane.f32.xlu0 %v478
        %v480 = vpop.xlane.xlu0 %479
        %v481 = vsel %vm411, %v402, -inf
        %482 = vmax.xlane.f32.xlu0 %v481
        %v483 = vpop.xlane.xlu0 %482
        %v484 = vsel %vm411, %v403, -inf
        %485 = vmax.xlane.f32.xlu0 %v484
        %v486 = vpop.xlane.xlu0 %485
        %v487 = vsel %vm411, %v404, -inf
        %488 = vmax.xlane.f32.xlu0 %v487
        %v489 = vpop.xlane.xlu0 %488
        %v490 = vsel %vm411, %v405, -inf
        %491 = vmax.xlane.f32.xlu0 %v490
        %v492 = vpop.xlane.xlu0 %491
        %v493 = vsel %vm411, %v406, -inf
        %494 = vmax.xlane.f32.xlu0 %v493
        %v495 = vpop.xlane.xlu0 %494
        %v496 = vsel %vm411, %v407, -inf
        %497 = vmax.xlane.f32.xlu0 %v496
        %v498 = vpop.xlane.xlu0 %497
        %v499 = vsel %vm411, %v408, -inf
        %500 = vmax.xlane.f32.xlu0 %v499
        %v501 = vpop.xlane.xlu0 %500
        %v502 = vsel %vm411, %v409, -inf
        %503 = vmax.xlane.f32.xlu0 %v502
        %v504 = vpop.xlane.xlu0 %503
        %v505 = vsel %vm411, %v410, -inf
        %506 = vmax.xlane.f32.xlu0 %v505
        %v507 = vpop.xlane.xlu0 %506
        %v508 = vlaneseq
        %v509 = vshrl.u32 %v508, 7
        %v510 = vadd.s32 %v509, 8
        %v543 = vlaneseq
        %v544 = vand.u32 %v543, 127
        %v545 = vperm.slane %v414, %v544
        %v546 = vadd.s32 %v544, 4294967288
        %v547 = vperm.slane %v417, %v546
        %vm548 = vcmask 130112
        %v549 = vsel %vm548, %v547, %v545
        %v550 = vperm.slane %v420, %v544
        %v551 = vperm.slane %v423, %v546
        %v552 = vsel %vm548, %v551, %v550
        %v553 = vperm.slane %v426, %v544
        %v554 = vperm.slane %v429, %v546
        %v555 = vsel %vm548, %v554, %v553
        %v556 = vperm.slane %v432, %v544
        %v557 = vperm.slane %v435, %v546
        %v558 = vsel %vm548, %v557, %v556
        %v559 = vperm.slane %v438, %v544
        %v560 = vperm.slane %v441, %v546
        %v561 = vsel %vm548, %v560, %v559
        %v562 = vperm.slane %v444, %v544
        %v563 = vperm.slane %v447, %v546
        %v564 = vsel %vm548, %v563, %v562
        %v565 = vperm.slane %v450, %v544
        %v566 = vperm.slane %v453, %v546
        %v567 = vsel %vm548, %v566, %v565
        %v568 = vperm.slane %v456, %v544
        %v569 = vperm.slane %v459, %v546
        %v570 = vsel %vm548, %v569, %v568
        %v571 = vperm.slane %v462, %v544
        %v572 = vperm.slane %v465, %v546
        %v573 = vsel %vm548, %v572, %v571
        %v574 = vperm.slane %v468, %v544
        %v575 = vperm.slane %v471, %v546
        %v576 = vsel %vm548, %v575, %v574
        %v577 = vperm.slane %v474, %v544
        %v578 = vperm.slane %v477, %v546
        %v579 = vsel %vm548, %v578, %v577
        %v580 = vperm.slane %v480, %v544
        %v581 = vperm.slane %v483, %v546
        %v582 = vsel %vm548, %v581, %v580
        %v583 = vperm.slane %v486, %v544
        %v584 = vperm.slane %v489, %v546
        %v585 = vsel %vm548, %v584, %v583
        %v586 = vperm.slane %v492, %v544
        %v587 = vperm.slane %v495, %v546
        %v588 = vsel %vm548, %v587, %v586
        %v589 = vperm.slane %v498, %v544
        %v590 = vperm.slane %v501, %v546
        %v591 = vsel %vm548, %v590, %v589
        %v592 = vperm.slane %v504, %v544
        %v593 = vperm.slane %v507, %v546
        %v594 = vsel %vm548, %v593, %v592
        %vm595 = vcmask 1041409
        %v596 = vsel %vm595, %v552, %v549
        %vm597 = vcmask 1042434
        %v598 = vsel %vm597, %v555, %v596
        %vm599 = vcmask 1043459
        %v600 = vsel %vm599, %v558, %v598
        %vm601 = vcmask 1044484
        %v602 = vsel %vm601, %v561, %v600
        %vm603 = vcmask 1045509
        %v604 = vsel %vm603, %v564, %v602
        %vm605 = vcmask 1046534
        %v606 = vsel %vm605, %v567, %v604
        %vm607 = vcmask 1047559
        %v608 = vsel %vm607, %v570, %v606
        %v609 = vsel %vm595, %v576, %v573
        %v610 = vsel %vm597, %v579, %v609
        %v611 = vsel %vm599, %v582, %v610
        %v612 = vsel %vm601, %v585, %v611
        %v613 = vsel %vm603, %v588, %v612
        %v614 = vsel %vm605, %v591, %v613
        %v615 = vsel %vm607, %v594, %v614
        %v618 = vrot.slane %v608, 5
        %v619 = vrot.slane %v615, 5
        %vm620 = vcmp.lt.s32.totalorder %v509, 3
        %v621 = vsel %vm620, %v618, %v619
        %v622 = vsel %vm620, %v619, %v618
        %v623 = vadd.s32 %v509, 4294967293
        %v624 = vadd.s32 %v510, 4294967293
        %vm625 = vcmp.ge.s32.totalorder %v623, 0
        %vm626 = vcmp.ge.s32.totalorder %v624, 0
        %vm627 = vcmp.lt.s32.totalorder %v623, 16
        %vm628 = vcmp.lt.s32.totalorder %v624, 16
        %vm629 = vmand %vm625, %vm627
        %vm630 = vmand %vm626, %vm628
        %v631 = vsel %vm629, %v622, 0.0
        %v632 = vsel %vm630, %v621, 0.0
        %v633 = vrot.slane %v608, 6
        %v634 = vrot.slane %v615, 6
        %vm635 = vcmp.lt.s32.totalorder %v509, 2
        %v636 = vsel %vm635, %v633, %v634
        %v637 = vsel %vm635, %v634, %v633
        %v638 = vadd.s32 %v509, 4294967294
        %v639 = vadd.s32 %v510, 4294967294
        %vm640 = vcmp.ge.s32.totalorder %v638, 0
        %vm641 = vcmp.ge.s32.totalorder %v639, 0
        %vm642 = vcmp.lt.s32.totalorder %v638, 16
        %vm643 = vcmp.lt.s32.totalorder %v639, 16
        %vm644 = vmand %vm640, %vm642
        %vm645 = vmand %vm641, %vm643
        %v646 = vsel %vm644, %v637, 0.0
        %v647 = vsel %vm645, %v636, 0.0
        %v648 = vrot.slane %v608, 7
        %v649 = vrot.slane %v615, 7
        %vm650 = vcmp.lt.s32.totalorder %v509, 1
        %v651 = vsel %vm650, %v648, %v649
        %v652 = vsel %vm650, %v649, %v648
        %v653 = vadd.s32 %v509, 4294967295
        %v654 = vadd.s32 %v510, 4294967295
        %vm655 = vcmp.ge.s32.totalorder %v653, 0
        %vm656 = vcmp.ge.s32.totalorder %v654, 0
        %vm657 = vcmp.lt.s32.totalorder %v653, 16
        %vm658 = vcmp.lt.s32.totalorder %v654, 16
        %vm659 = vmand %vm655, %vm657
        %vm660 = vmand %vm656, %vm658
        %v661 = vsel %vm659, %v652, 0.0
        %v662 = vsel %vm660, %v651, 0.0
        %vm663 = vcmp.ge.s32.totalorder %v509, 0
        %vm664 = vcmp.ge.s32.totalorder %v510, 0
        %vm665 = vcmp.lt.s32.totalorder %v509, 16
        %vm666 = vcmp.lt.s32.totalorder %v510, 16
        %vm667 = vmand %vm663, %vm665
        %vm668 = vmand %vm664, %vm666
        %v669 = vsel %vm667, %v608, 0.0
        %v670 = vsel %vm668, %v615, 0.0
        %v671 = vrot.slane %v608, 1
        %v672 = vrot.slane %v615, 1
        %vm673 = vcmp.lt.s32.totalorder %v509, 7
        %v674 = vsel %vm673, %v671, %v672
        %v675 = vsel %vm673, %v672, %v671
        %v676 = vadd.s32 %v509, 1
        %v677 = vadd.s32 %v510, 1
        %vm678 = vcmp.ge.s32.totalorder %v676, 0
        %vm679 = vcmp.ge.s32.totalorder %v677, 0
        %vm680 = vcmp.lt.s32.totalorder %v676, 16
        %vm681 = vcmp.lt.s32.totalorder %v677, 16
        %vm682 = vmand %vm678, %vm680
        %vm683 = vmand %vm679, %vm681
        %v684 = vsel %vm682, %v674, 0.0
        %v685 = vsel %vm683, %v675, 0.0
        %v686 = vrot.slane %v608, 2
        %v687 = vrot.slane %v615, 2
        %vm688 = vcmp.lt.s32.totalorder %v509, 6
        %v689 = vsel %vm688, %v686, %v687
        %v690 = vsel %vm688, %v687, %v686
        %v691 = vadd.s32 %v509, 2
        %v692 = vadd.s32 %v510, 2
        %vm693 = vcmp.ge.s32.totalorder %v691, 0
        %vm694 = vcmp.ge.s32.totalorder %v692, 0
        %vm695 = vcmp.lt.s32.totalorder %v691, 16
        %vm696 = vcmp.lt.s32.totalorder %v692, 16
        %vm697 = vmand %vm693, %vm695
        %vm698 = vmand %vm694, %vm696
        %v699 = vsel %vm697, %v689, 0.0
        %v700 = vsel %vm698, %v690, 0.0
        %v701 = vrot.slane %v608, 3
        %v702 = vrot.slane %v615, 3
        %vm703 = vcmp.lt.s32.totalorder %v509, 5
        %v704 = vsel %vm703, %v701, %v702
        %v705 = vsel %vm703, %v702, %v701
        %v706 = vadd.s32 %v509, 3
        %v707 = vadd.s32 %v510, 3
        %vm708 = vcmp.ge.s32.totalorder %v706, 0
        %vm709 = vcmp.ge.s32.totalorder %v707, 0
        %vm710 = vcmp.lt.s32.totalorder %v706, 16
        %vm711 = vcmp.lt.s32.totalorder %v707, 16
        %vm712 = vmand %vm708, %vm710
        %vm713 = vmand %vm709, %vm711
        %v714 = vsel %vm712, %v704, 0.0
        %v715 = vsel %vm713, %v705, 0.0
        %718 = vrot.lane.b32.xlu0 %v646, 16
        %v719 = vpop.permute.xlu0 %718
        %720 = vrot.lane.b32.xlu0 %v647, 16
        %v721 = vpop.permute.xlu0 %720
        %726 = vrot.lane.b32.xlu0 %v661, 32
        %v727 = vpop.permute.xlu0 %726
        %728 = vrot.lane.b32.xlu0 %v662, 32
        %v729 = vpop.permute.xlu0 %728
        %734 = vrot.lane.b32.xlu0 %v669, 48
        %v735 = vpop.permute.xlu0 %734
        %736 = vrot.lane.b32.xlu0 %v670, 48
        %v737 = vpop.permute.xlu0 %736
        %742 = vrot.lane.b32.xlu0 %v684, 64
        %v743 = vpop.permute.xlu0 %742
        %744 = vrot.lane.b32.xlu0 %v685, 64
        %v745 = vpop.permute.xlu0 %744
        %750 = vrot.lane.b32.xlu0 %v699, 80
        %v751 = vpop.permute.xlu0 %750
        %752 = vrot.lane.b32.xlu0 %v700, 80
        %v753 = vpop.permute.xlu0 %752
        %758 = vrot.lane.b32.xlu0 %v714, 96
        %v759 = vpop.permute.xlu0 %758
        %760 = vrot.lane.b32.xlu0 %v715, 96
        %v761 = vpop.permute.xlu0 %760
        %vm764 = vcmask 130048
        %v765 = vsel %vm764, %v631, %v719
        %v766 = vsel %vm764, %v632, %v721
        %v767 = vsel %vm411, %v765, %v727
        %v768 = vsel %vm411, %v766, %v729
        %vm769 = vcmask 392192
        %v770 = vsel %vm769, %v767, %v735
        %v771 = vsel %vm769, %v768, %v737
        %vm772 = vcmask 523264
        %v773 = vsel %vm772, %v770, %v743
        %v774 = vsel %vm772, %v771, %v745
        %vm775 = vcmask 654336
        %v776 = vsel %vm775, %v773, %v751
        %v777 = vsel %vm775, %v774, %v753
        %vm778 = vcmask 785408
        %v779 = vsel %vm778, %v776, %v759
        %v780 = vsel %vm778, %v777, %v761
        %v781 = vld [vmem:[%s2] sm:$0xff]
        %v782 = vld [vmem:[%s2 + $0x8] sm:$0xff]
        %v783 = vld [vmem:[%s2 + $0x10] sm:$0xff]
        %v784 = vld [vmem:[%s2 + $0x18] sm:$0xff]
        %v785 = vld [vmem:[%s2 + $0x20] sm:$0xff]
        %v786 = vld [vmem:[%s2 + $0x28] sm:$0xff]
        %v787 = vld [vmem:[%s2 + $0x30] sm:$0xff]
        %v788 = vld [vmem:[%s2 + $0x38] sm:$0xff]
        %v789 = vld [vmem:[%s2 + $0x40] sm:$0xff]
        %v790 = vld [vmem:[%s2 + $0x48] sm:$0xff]
        %v791 = vld [vmem:[%s2 + $0x50] sm:$0xff]
        %v792 = vld [vmem:[%s2 + $0x58] sm:$0xff]
        %v793 = vld [vmem:[%s2 + $0x60] sm:$0xff]
        %v794 = vld [vmem:[%s2 + $0x68] sm:$0xff]
        %vm795 = vcmask 916480
        %v797 = vsel %vm795, %v779, 0
        %v800 = vsel %vm795, %v780, 0
        %802 = vmatpush.msra.mxu0 0.0
        %803 = vmatpush.msra.mxu0 0.0
        %804 = vmatpush.msra.mxu0 %v794
        %805 = vmatpush.msra.mxu0 %v793
        %806 = vmatpush.msra.mxu0 %v792
        %807 = vmatpush.msra.mxu0 %v791
        %808 = vmatpush.msra.mxu0 %v790
        %809 = vmatpush.msra.mxu0 %v789
        %810 = vmatpush.msra.mxu0 %v788
        %811 = vmatpush.msra.mxu0 %v787
        %812 = vmatpush.msra.mxu0 %v786
        %813 = vmatpush.msra.mxu0 %v785
        %814 = vmatpush.msra.mxu0 %v784
        %815 = vmatpush.msra.mxu0 %v783
        %816 = vmatpush.msra.mxu0 %v782
        %817 = vmatpush.msra.mxu0 %v781
        %818 = vmatmul.f32.gmra.mxu0 %v797
        %v819 = vpop.f32.mrf.mxu0
        %v820 = vadd.f32 0.0, %v819
        %821 = vmatmul.f32.gmra.mxu0 %v800
        %v822 = vpop.f32.mrf.mxu0
        %v823 = vadd.f32 0.0, %v822
        %824 = vdwg.mxu0
        %v825 = vxor.u32 %v820, 2147483648
        %v826 = vxor.u32 %v823, 2147483648
        %v827 = vmul.f32 %v825, 1.442695
        %v828 = vpow.pop %v827
        %v829 = vmul.f32 %v826, 1.442695
        %v830 = vpow.pop %v829
        %v831 = vadd.f32 %v828, 1.0
        %v832 = vadd.f32 %v830, 1.0
        %v833 = vrcp.pop %v831
        %v834 = vmul.f32 %v831, %v833
        %v835 = vsub.f32 1.0, %v834
        %v836 = vmul.f32 %v833, %v835
        %v837 = vadd.f32 %v833, %v836
        %vm838 = vweird.f32 %v831
        %vm839 = vweird.f32 %v833
        %vm840 = vmor %vm838, %vm839
        %v841 = vsel %vm840, %v833, %v837
        %v842 = vand.u32 2147483647, %v831
        %vm843 = vcmp.eq.f32.partialorder %v842, 8.507059e+37
        %v844 = vand.u32 %v831, 2147483648
        %v845 = vor.u32 1.1754944e-38, %v844
        %v846 = vsel %vm843, %v845, %v841
        %v847 = vmul.f32 1.0, %v846
        %v848 = vrcp.pop %v832
        %v849 = vmul.f32 %v832, %v848
        %v850 = vsub.f32 1.0, %v849
        %v851 = vmul.f32 %v848, %v850
        %v852 = vadd.f32 %v848, %v851
        %vm853 = vweird.f32 %v832
        %vm854 = vweird.f32 %v848
        %vm855 = vmor %vm853, %vm854
        %v856 = vsel %vm855, %v848, %v852
        %v857 = vand.u32 2147483647, %v832
        %vm858 = vcmp.eq.f32.partialorder %v857, 8.507059e+37
        %v859 = vand.u32 %v832, 2147483648
        %v860 = vor.u32 1.1754944e-38, %v859
        %v861 = vsel %vm858, %v860, %v856
        %v862 = vmul.f32 1.0, %v861
        %v863 = vperm.slane %v847, 0
        %v864 = vlaneseq
        %v865 = vshrl.u32 %v864, 7
        %867 = vset.pattern.permute.xlu0 %v865
        %868 = vperm.xlu0 %867, %v863
        %v869 = vpop.permute.xlu0 %868
        %v870 = vlaneseq
        %v871 = vshrl.u32 %v870, 7
        %v872 = vadd.s32 %v871, 8
        %873 = vset.pattern.permute.xlu0 %v872
        %874 = vperm.xlu0 %873, %v863
        %v875 = vpop.permute.xlu0 %874
        %v876 = vperm.slane %v847, 1
        %v877 = vlaneseq
        %v878 = vshrl.u32 %v877, 7
        %880 = vset.pattern.permute.xlu0 %v878
        %881 = vperm.xlu0 %880, %v876
        %v882 = vpop.permute.xlu0 %881
        %v883 = vlaneseq
        %v884 = vshrl.u32 %v883, 7
        %v885 = vadd.s32 %v884, 8
        %886 = vset.pattern.permute.xlu0 %v885
        %887 = vperm.xlu0 %886, %v876
        %v888 = vpop.permute.xlu0 %887
        %v889 = vperm.slane %v847, 2
        %v890 = vlaneseq
        %v891 = vshrl.u32 %v890, 7
        %893 = vset.pattern.permute.xlu0 %v891
        %894 = vperm.xlu0 %893, %v889
        %v895 = vpop.permute.xlu0 %894
        %v896 = vlaneseq
        %v897 = vshrl.u32 %v896, 7
        %v898 = vadd.s32 %v897, 8
        %899 = vset.pattern.permute.xlu0 %v898
        %900 = vperm.xlu0 %899, %v889
        %v901 = vpop.permute.xlu0 %900
        %v902 = vperm.slane %v847, 3
        %v903 = vlaneseq
        %v904 = vshrl.u32 %v903, 7
        %906 = vset.pattern.permute.xlu0 %v904
        %907 = vperm.xlu0 %906, %v902
        %v908 = vpop.permute.xlu0 %907
        %v909 = vlaneseq
        %v910 = vshrl.u32 %v909, 7
        %v911 = vadd.s32 %v910, 8
        %912 = vset.pattern.permute.xlu0 %v911
        %913 = vperm.xlu0 %912, %v902
        %v914 = vpop.permute.xlu0 %913
        %v915 = vperm.slane %v847, 4
        %v916 = vlaneseq
        %v917 = vshrl.u32 %v916, 7
        %919 = vset.pattern.permute.xlu0 %v917
        %920 = vperm.xlu0 %919, %v915
        %v921 = vpop.permute.xlu0 %920
        %v922 = vlaneseq
        %v923 = vshrl.u32 %v922, 7
        %v924 = vadd.s32 %v923, 8
        %925 = vset.pattern.permute.xlu0 %v924
        %926 = vperm.xlu0 %925, %v915
        %v927 = vpop.permute.xlu0 %926
        %v928 = vperm.slane %v847, 5
        %v929 = vlaneseq
        %v930 = vshrl.u32 %v929, 7
        %932 = vset.pattern.permute.xlu0 %v930
        %933 = vperm.xlu0 %932, %v928
        %v934 = vpop.permute.xlu0 %933
        %v935 = vlaneseq
        %v936 = vshrl.u32 %v935, 7
        %v937 = vadd.s32 %v936, 8
        %938 = vset.pattern.permute.xlu0 %v937
        %939 = vperm.xlu0 %938, %v928
        %v940 = vpop.permute.xlu0 %939
        %v941 = vperm.slane %v847, 6
        %v942 = vlaneseq
        %v943 = vshrl.u32 %v942, 7
        %945 = vset.pattern.permute.xlu0 %v943
        %946 = vperm.xlu0 %945, %v941
        %v947 = vpop.permute.xlu0 %946
        %v948 = vlaneseq
        %v949 = vshrl.u32 %v948, 7
        %v950 = vadd.s32 %v949, 8
        %951 = vset.pattern.permute.xlu0 %v950
        %952 = vperm.xlu0 %951, %v941
        %v953 = vpop.permute.xlu0 %952
        %v954 = vperm.slane %v847, 7
        %v955 = vlaneseq
        %v956 = vshrl.u32 %v955, 7
        %958 = vset.pattern.permute.xlu0 %v956
        %959 = vperm.xlu0 %958, %v954
        %v960 = vpop.permute.xlu0 %959
        %v961 = vlaneseq
        %v962 = vshrl.u32 %v961, 7
        %v963 = vadd.s32 %v962, 8
        %964 = vset.pattern.permute.xlu0 %v963
        %965 = vperm.xlu0 %964, %v954
        %v966 = vpop.permute.xlu0 %965
        %v967 = vperm.slane %v862, 0
        %v968 = vlaneseq
        %v969 = vshrl.u32 %v968, 7
        %971 = vset.pattern.permute.xlu0 %v969
        %972 = vperm.xlu0 %971, %v967
        %v973 = vpop.permute.xlu0 %972
        %v974 = vlaneseq
        %v975 = vshrl.u32 %v974, 7
        %v976 = vadd.s32 %v975, 8
        %977 = vset.pattern.permute.xlu0 %v976
        %978 = vperm.xlu0 %977, %v967
        %v979 = vpop.permute.xlu0 %978
        %v980 = vperm.slane %v862, 1
        %v981 = vlaneseq
        %v982 = vshrl.u32 %v981, 7
        %984 = vset.pattern.permute.xlu0 %v982
        %985 = vperm.xlu0 %984, %v980
        %v986 = vpop.permute.xlu0 %985
        %v987 = vlaneseq
        %v988 = vshrl.u32 %v987, 7
        %v989 = vadd.s32 %v988, 8
        %990 = vset.pattern.permute.xlu0 %v989
        %991 = vperm.xlu0 %990, %v980
        %v992 = vpop.permute.xlu0 %991
        %v993 = vperm.slane %v862, 2
        %v994 = vlaneseq
        %v995 = vshrl.u32 %v994, 7
        %997 = vset.pattern.permute.xlu0 %v995
        %998 = vperm.xlu0 %997, %v993
        %v999 = vpop.permute.xlu0 %998
        %v1000 = vlaneseq
        %v1001 = vshrl.u32 %v1000, 7
        %v1002 = vadd.s32 %v1001, 8
        %1003 = vset.pattern.permute.xlu0 %v1002
        %1004 = vperm.xlu0 %1003, %v993
        %v1005 = vpop.permute.xlu0 %1004
        %v1006 = vperm.slane %v862, 3
        %v1007 = vlaneseq
        %v1008 = vshrl.u32 %v1007, 7
        %1010 = vset.pattern.permute.xlu0 %v1008
        %1011 = vperm.xlu0 %1010, %v1006
        %v1012 = vpop.permute.xlu0 %1011
        %v1013 = vlaneseq
        %v1014 = vshrl.u32 %v1013, 7
        %v1015 = vadd.s32 %v1014, 8
        %1016 = vset.pattern.permute.xlu0 %v1015
        %1017 = vperm.xlu0 %1016, %v1006
        %v1018 = vpop.permute.xlu0 %1017
        %v1019 = vperm.slane %v862, 4
        %v1020 = vlaneseq
        %v1021 = vshrl.u32 %v1020, 7
        %1023 = vset.pattern.permute.xlu0 %v1021
        %1024 = vperm.xlu0 %1023, %v1019
        %v1025 = vpop.permute.xlu0 %1024
        %v1026 = vlaneseq
        %v1027 = vshrl.u32 %v1026, 7
        %v1028 = vadd.s32 %v1027, 8
        %1029 = vset.pattern.permute.xlu0 %v1028
        %1030 = vperm.xlu0 %1029, %v1019
        %v1031 = vpop.permute.xlu0 %1030
        %v1032 = vperm.slane %v862, 5
        %v1033 = vlaneseq
        %v1034 = vshrl.u32 %v1033, 7
        %1036 = vset.pattern.permute.xlu0 %v1034
        %1037 = vperm.xlu0 %1036, %v1032
        %v1038 = vpop.permute.xlu0 %1037
        %v1039 = vlaneseq
        %v1040 = vshrl.u32 %v1039, 7
        %v1041 = vadd.s32 %v1040, 8
        %1042 = vset.pattern.permute.xlu0 %v1041
        %1043 = vperm.xlu0 %1042, %v1032
        %v1044 = vpop.permute.xlu0 %1043
        %v1045 = vperm.slane %v862, 6
        %v1046 = vlaneseq
        %v1047 = vshrl.u32 %v1046, 7
        %1049 = vset.pattern.permute.xlu0 %v1047
        %1050 = vperm.xlu0 %1049, %v1045
        %v1051 = vpop.permute.xlu0 %1050
        %v1052 = vlaneseq
        %v1053 = vshrl.u32 %v1052, 7
        %v1054 = vadd.s32 %v1053, 8
        %1055 = vset.pattern.permute.xlu0 %v1054
        %1056 = vperm.xlu0 %1055, %v1045
        %v1057 = vpop.permute.xlu0 %1056
        %v1058 = vperm.slane %v862, 7
        %v1059 = vlaneseq
        %v1060 = vshrl.u32 %v1059, 7
        %1062 = vset.pattern.permute.xlu0 %v1060
        %1063 = vperm.xlu0 %1062, %v1058
        %v1064 = vpop.permute.xlu0 %1063
        %v1065 = vlaneseq
        %v1066 = vshrl.u32 %v1065, 7
        %v1067 = vadd.s32 %v1066, 8
        %1068 = vset.pattern.permute.xlu0 %v1067
        %1069 = vperm.xlu0 %1068, %v1058
        %v1070 = vpop.permute.xlu0 %1069
        %v1071 = vmul.f32 %v315, %v869
        %v1072 = vmul.f32 %v316, %v875
        %v1073 = vmul.f32 %v317, %v882
        %v1074 = vmul.f32 %v318, %v888
        %v1075 = vmul.f32 %v319, %v895
        %v1076 = vmul.f32 %v320, %v901
        %v1077 = vmul.f32 %v321, %v908
        %v1078 = vmul.f32 %v322, %v914
        %v1079 = vmul.f32 %v323, %v921
        %v1080 = vmul.f32 %v324, %v927
        %v1081 = vmul.f32 %v325, %v934
        %v1082 = vmul.f32 %v326, %v940
        %v1083 = vmul.f32 %v327, %v947
        %v1084 = vmul.f32 %v328, %v953
        %v1085 = vmul.f32 %v329, %v960
        %v1086 = vmul.f32 %v330, %v966
        %v1087 = vmul.f32 %v331, %v973
        %v1088 = vmul.f32 %v332, %v979
        %v1089 = vmul.f32 %v333, %v986
        %v1090 = vmul.f32 %v334, %v992
        %v1091 = vmul.f32 %v335, %v999
        %v1092 = vmul.f32 %v336, %v1005
        %v1093 = vmul.f32 %v337, %v1012
        %v1094 = vmul.f32 %v338, %v1018
        %v1095 = vmul.f32 %v339, %v1025
        %v1096 = vmul.f32 %v340, %v1031
        %v1097 = vmul.f32 %v341, %v1038
        %v1098 = vmul.f32 %v342, %v1044
        %v1099 = vmul.f32 %v343, %v1051
        %v1100 = vmul.f32 %v344, %v1057
        %v1101 = vmul.f32 %v345, %v1064
        %v1102 = vmul.f32 %v346, %v1070
        %v1103 = vsel %vm411, %v1071, -inf
        %v1104 = vsel %vm411, %v1072, -inf
        %v1105 = vsel %vm411, %v1073, -inf
        %v1106 = vsel %vm411, %v1074, -inf
        %v1107 = vsel %vm411, %v1075, -inf
        %v1108 = vmax.f32 %v1103, %v1107
        %v1109 = vsel %vm411, %v1076, -inf
        %v1110 = vmax.f32 %v1104, %v1109
        %v1111 = vsel %vm411, %v1077, -inf
        %v1112 = vmax.f32 %v1105, %v1111
        %v1113 = vsel %vm411, %v1078, -inf
        %v1114 = vmax.f32 %v1106, %v1113
        %v1115 = vsel %vm411, %v1079, -inf
        %v1116 = vmax.f32 %v1108, %v1115
        %v1117 = vsel %vm411, %v1080, -inf
        %v1118 = vmax.f32 %v1110, %v1117
        %v1119 = vsel %vm411, %v1081, -inf
        %v1120 = vmax.f32 %v1112, %v1119
        %v1121 = vsel %vm411, %v1082, -inf
        %v1122 = vmax.f32 %v1114, %v1121
        %v1123 = vsel %vm411, %v1083, -inf
        %v1124 = vmax.f32 %v1116, %v1123
        %v1125 = vsel %vm411, %v1084, -inf
        %v1126 = vmax.f32 %v1118, %v1125
        %v1127 = vsel %vm411, %v1085, -inf
        %v1128 = vmax.f32 %v1120, %v1127
        %v1129 = vsel %vm411, %v1086, -inf
        %v1130 = vmax.f32 %v1122, %v1129
        %v1131 = vsel %vm411, %v1087, -inf
        %v1132 = vmax.f32 %v1124, %v1131
        %v1133 = vsel %vm411, %v1088, -inf
        %v1134 = vmax.f32 %v1126, %v1133
        %v1135 = vsel %vm411, %v1089, -inf
        %v1136 = vmax.f32 %v1128, %v1135
        %v1137 = vsel %vm411, %v1090, -inf
        %v1138 = vmax.f32 %v1130, %v1137
        %v1139 = vsel %vm411, %v1091, -inf
        %v1140 = vmax.f32 %v1132, %v1139
        %v1141 = vsel %vm411, %v1092, -inf
        %v1142 = vmax.f32 %v1134, %v1141
        %v1143 = vsel %vm411, %v1093, -inf
        %v1144 = vmax.f32 %v1136, %v1143
        %v1145 = vsel %vm411, %v1094, -inf
        %v1146 = vmax.f32 %v1138, %v1145
        %v1147 = vsel %vm411, %v1095, -inf
        %v1148 = vmax.f32 %v1140, %v1147
        %v1149 = vsel %vm411, %v1096, -inf
        %v1150 = vmax.f32 %v1142, %v1149
        %v1151 = vsel %vm411, %v1097, -inf
        %v1152 = vmax.f32 %v1144, %v1151
        %v1153 = vsel %vm411, %v1098, -inf
        %v1154 = vmax.f32 %v1146, %v1153
        %v1155 = vsel %vm411, %v1099, -inf
        %v1156 = vmax.f32 %v1148, %v1155
        %v1157 = vsel %vm411, %v1100, -inf
        %v1158 = vmax.f32 %v1150, %v1157
        %v1159 = vsel %vm411, %v1101, -inf
        %v1160 = vmax.f32 %v1152, %v1159
        %v1161 = vsel %vm411, %v1102, -inf
        %v1162 = vmax.f32 %v1154, %v1161
        %v1163 = vmax.f32 %v1156, %v1158
        %v1164 = vmax.f32 %v1160, %v1162
        %v1165 = vmax.f32 %v1163, %v1164
        %v1166 = vrot.slane %v1165, 4
        %v1167 = vmax.f32 %v1165, %v1166
        %v1168 = vrot.slane %v1167, 2
        %v1169 = vmax.f32 %v1167, %v1168
        %v1170 = vrot.slane %v1169, 1
        %v1171 = vmax.f32 %v1169, %v1170
        %v1172 = vmul.f32 %v347, %v869
        %v1173 = vmul.f32 %v348, %v875
        %v1174 = vmul.f32 %v349, %v882
        %v1175 = vmul.f32 %v350, %v888
        %v1176 = vmul.f32 %v351, %v895
        %v1177 = vmul.f32 %v352, %v901
        %v1178 = vmul.f32 %v353, %v908
        %v1179 = vmul.f32 %v354, %v914
        %v1180 = vmul.f32 %v355, %v921
        %v1181 = vmul.f32 %v356, %v927
        %v1182 = vmul.f32 %v357, %v934
        %v1183 = vmul.f32 %v358, %v940
        %v1184 = vmul.f32 %v359, %v947
        %v1185 = vmul.f32 %v360, %v953
        %v1186 = vmul.f32 %v361, %v960
        %v1187 = vmul.f32 %v362, %v966
        %v1188 = vmul.f32 %v363, %v973
        %v1189 = vmul.f32 %v364, %v979
        %v1190 = vmul.f32 %v365, %v986
        %v1191 = vmul.f32 %v366, %v992
        %v1192 = vmul.f32 %v367, %v999
        %v1193 = vmul.f32 %v368, %v1005
        %v1194 = vmul.f32 %v369, %v1012
        %v1195 = vmul.f32 %v370, %v1018
        %v1196 = vmul.f32 %v371, %v1025
        %v1197 = vmul.f32 %v372, %v1031
        %v1198 = vmul.f32 %v373, %v1038
        %v1199 = vmul.f32 %v374, %v1044
        %v1200 = vmul.f32 %v375, %v1051
        %v1201 = vmul.f32 %v376, %v1057
        %v1202 = vmul.f32 %v377, %v1064
        %v1203 = vmul.f32 %v378, %v1070
        %v1204 = vsel %vm411, %v1172, -inf
        %v1205 = vsel %vm411, %v1173, -inf
        %v1206 = vsel %vm411, %v1174, -inf
        %v1207 = vsel %vm411, %v1175, -inf
        %v1208 = vsel %vm411, %v1176, -inf
        %v1209 = vmax.f32 %v1204, %v1208
        %v1210 = vsel %vm411, %v1177, -inf
        %v1211 = vmax.f32 %v1205, %v1210
        %v1212 = vsel %vm411, %v1178, -inf
        %v1213 = vmax.f32 %v1206, %v1212
        %v1214 = vsel %vm411, %v1179, -inf
        %v1215 = vmax.f32 %v1207, %v1214
        %v1216 = vsel %vm411, %v1180, -inf
        %v1217 = vmax.f32 %v1209, %v1216
        %v1218 = vsel %vm411, %v1181, -inf
        %v1219 = vmax.f32 %v1211, %v1218
        %v1220 = vsel %vm411, %v1182, -inf
        %v1221 = vmax.f32 %v1213, %v1220
        %v1222 = vsel %vm411, %v1183, -inf
        %v1223 = vmax.f32 %v1215, %v1222
        %v1224 = vsel %vm411, %v1184, -inf
        %v1225 = vmax.f32 %v1217, %v1224
        %v1226 = vsel %vm411, %v1185, -inf
        %v1227 = vmax.f32 %v1219, %v1226
        %v1228 = vsel %vm411, %v1186, -inf
        %v1229 = vmax.f32 %v1221, %v1228
        %v1230 = vsel %vm411, %v1187, -inf
        %v1231 = vmax.f32 %v1223, %v1230
        %v1232 = vsel %vm411, %v1188, -inf
        %v1233 = vmax.f32 %v1225, %v1232
        %v1234 = vsel %vm411, %v1189, -inf
        %v1235 = vmax.f32 %v1227, %v1234
        %v1236 = vsel %vm411, %v1190, -inf
        %v1237 = vmax.f32 %v1229, %v1236
        %v1238 = vsel %vm411, %v1191, -inf
        %v1239 = vmax.f32 %v1231, %v1238
        %v1240 = vsel %vm411, %v1192, -inf
        %v1241 = vmax.f32 %v1233, %v1240
        %v1242 = vsel %vm411, %v1193, -inf
        %v1243 = vmax.f32 %v1235, %v1242
        %v1244 = vsel %vm411, %v1194, -inf
        %v1245 = vmax.f32 %v1237, %v1244
        %v1246 = vsel %vm411, %v1195, -inf
        %v1247 = vmax.f32 %v1239, %v1246
        %v1248 = vsel %vm411, %v1196, -inf
        %v1249 = vmax.f32 %v1241, %v1248
        %v1250 = vsel %vm411, %v1197, -inf
        %v1251 = vmax.f32 %v1243, %v1250
        %v1252 = vsel %vm411, %v1198, -inf
        %v1253 = vmax.f32 %v1245, %v1252
        %v1254 = vsel %vm411, %v1199, -inf
        %v1255 = vmax.f32 %v1247, %v1254
        %v1256 = vsel %vm411, %v1200, -inf
        %v1257 = vmax.f32 %v1249, %v1256
        %v1258 = vsel %vm411, %v1201, -inf
        %v1259 = vmax.f32 %v1251, %v1258
        %v1260 = vsel %vm411, %v1202, -inf
        %v1261 = vmax.f32 %v1253, %v1260
        %v1262 = vsel %vm411, %v1203, -inf
        %v1263 = vmax.f32 %v1255, %v1262
        %v1264 = vmax.f32 %v1257, %v1259
        %v1265 = vmax.f32 %v1261, %v1263
        %v1266 = vmax.f32 %v1264, %v1265
        %v1267 = vrot.slane %v1266, 4
        %v1268 = vmax.f32 %v1266, %v1267
        %v1269 = vrot.slane %v1268, 2
        %v1270 = vmax.f32 %v1268, %v1269
        %v1271 = vrot.slane %v1270, 1
        %v1272 = vmax.f32 %v1270, %v1271
        %vm1273 = vcmask 1040384
        %v1274 = vsel %vm1273, %v1171, %v1272
        %v1275 = vld [vmem:[%s3] sm:$0x3]
        %v1276 = vld [vmem:[%s3 + $0x2] sm:$0x3]
        %v1277 = vld [vmem:[%s4] sm:$0xff]
        %v1278 = vld [vmem:[%s4 + $0x8] sm:$0xff]
        %v1279 = vld [vmem:[%s4 + $0x10] sm:$0xff]
        %v1280 = vld [vmem:[%s4 + $0x18] sm:$0xff]
        %v1281 = vld [vmem:[%s4 + $0x20] sm:$0xff]
        %v1282 = vld [vmem:[%s4 + $0x28] sm:$0xff]
        %v1283 = vld [vmem:[%s4 + $0x30] sm:$0xff]
        %v1284 = vld [vmem:[%s4 + $0x38] sm:$0xff]
        %v1286 = vrot.slane %v1274, 1
        %v1287 = vperm.slane %v1274, 0
        %v1288 = vperm.slane %v1286, 0
        %v1291 = vmul.f32 %v1275, %v1287
        %v1292 = vmul.f32 %v1276, %v1288
        %vm1293 = vcmask 254976
        %v1294 = vsel %vm1293, %v1291, 0.0
        %1295 = vadd.xlane.f32.xlu0 %v1294
        %v1296 = vpop.xlane.xlu0 %1295
        %v1297 = vsel %vm1293, %v1292, 0.0
        %1298 = vadd.xlane.f32.xlu0 %v1297
        %v1299 = vpop.xlane.xlu0 %1298
        %v1300 = vmax.f32 %v1296, 0.0
        %v1301 = vmax.f32 %v1299, 0.0
        %v1304 = vperm.slane %v1300, %v544
        %v1305 = vperm.slane %v1301, %v544
        %v1306 = vsel %vm597, %v1304, %v1304
        %v1307 = vsel %vm599, %v1304, %v1306
        %v1308 = vsel %vm601, %v1304, %v1307
        %v1309 = vsel %vm603, %v1304, %v1308
        %v1310 = vsel %vm605, %v1304, %v1309
        %v1311 = vsel %vm607, %v1304, %v1310
        %v1312 = vsel %vm597, %v1305, %v1305
        %v1313 = vsel %vm599, %v1305, %v1312
        %v1314 = vsel %vm601, %v1305, %v1313
        %v1315 = vsel %vm603, %v1305, %v1314
        %v1316 = vsel %vm605, %v1305, %v1315
        %v1317 = vsel %vm607, %v1305, %v1316
        %v1320 = vmul.f32 %v1277, %v1311
        %v1321 = vmul.f32 %v1278, %v1311
        %v1322 = vmul.f32 %v1279, %v1311
        %v1323 = vmul.f32 %v1280, %v1311
        %v1324 = vmul.f32 %v1281, %v1317
        %v1325 = vmul.f32 %v1282, %v1317
        %v1326 = vmul.f32 %v1283, %v1317
        %v1327 = vmul.f32 %v1284, %v1317
        %vm1328 = vcmask 15360
        %v1329 = vsel %vm1328, %v1320, 0.0
        %1330 = vadd.xlane.f32.xlu0 %v1329
        %v1331 = vpop.xlane.xlu0 %1330
        %v1332 = vsel %vm1328, %v1321, 0.0
        %1333 = vadd.xlane.f32.xlu0 %v1332
        %v1334 = vpop.xlane.xlu0 %1333
        %v1335 = vsel %vm1328, %v1322, 0.0
        %1336 = vadd.xlane.f32.xlu0 %v1335
        %v1337 = vpop.xlane.xlu0 %1336
        %v1338 = vsel %vm1328, %v1323, 0.0
        %1339 = vadd.xlane.f32.xlu0 %v1338
        %v1340 = vpop.xlane.xlu0 %1339
        %v1341 = vsel %vm1328, %v1324, 0.0
        %1342 = vadd.xlane.f32.xlu0 %v1341
        %v1343 = vpop.xlane.xlu0 %1342
        %v1344 = vsel %vm1328, %v1325, 0.0
        %1345 = vadd.xlane.f32.xlu0 %v1344
        %v1346 = vpop.xlane.xlu0 %1345
        %v1347 = vsel %vm1328, %v1326, 0.0
        %1348 = vadd.xlane.f32.xlu0 %v1347
        %v1349 = vpop.xlane.xlu0 %1348
        %v1350 = vsel %vm1328, %v1327, 0.0
        %1351 = vadd.xlane.f32.xlu0 %v1350
        %v1352 = vpop.xlane.xlu0 %1351
        %v1353 = vxor.u32 %v1331, 2147483648
        %v1354 = vxor.u32 %v1334, 2147483648
        %v1355 = vxor.u32 %v1337, 2147483648
        %v1356 = vxor.u32 %v1340, 2147483648
        %v1357 = vxor.u32 %v1343, 2147483648
        %v1358 = vxor.u32 %v1346, 2147483648
        %v1359 = vxor.u32 %v1349, 2147483648
        %v1360 = vxor.u32 %v1352, 2147483648
        %v1361 = vmul.f32 %v1353, 1.442695
        %v1362 = vpow.pop %v1361
        %v1363 = vmul.f32 %v1354, 1.442695
        %v1364 = vpow.pop %v1363
        %v1365 = vmul.f32 %v1355, 1.442695
        %v1366 = vpow.pop %v1365
        %v1367 = vmul.f32 %v1356, 1.442695
        %v1368 = vpow.pop %v1367
        %v1369 = vmul.f32 %v1357, 1.442695
        %v1370 = vpow.pop %v1369
        %v1371 = vmul.f32 %v1358, 1.442695
        %v1372 = vpow.pop %v1371
        %v1373 = vmul.f32 %v1359, 1.442695
        %v1374 = vpow.pop %v1373
        %v1375 = vmul.f32 %v1360, 1.442695
        %v1376 = vpow.pop %v1375
        %v1377 = vadd.f32 %v1362, 1.0
        %v1378 = vadd.f32 %v1364, 1.0
        %v1379 = vadd.f32 %v1366, 1.0
        %v1380 = vadd.f32 %v1368, 1.0
        %v1381 = vadd.f32 %v1370, 1.0
        %v1382 = vadd.f32 %v1372, 1.0
        %v1383 = vadd.f32 %v1374, 1.0
        %v1384 = vadd.f32 %v1376, 1.0
        %v1385 = vrcp.pop %v1377
        %v1386 = vmul.f32 %v1377, %v1385
        %v1387 = vsub.f32 1.0, %v1386
        %v1388 = vmul.f32 %v1385, %v1387
        %v1389 = vadd.f32 %v1385, %v1388
        %vm1390 = vweird.f32 %v1377
        %vm1391 = vweird.f32 %v1385
        %vm1392 = vmor %vm1390, %vm1391
        %v1393 = vsel %vm1392, %v1385, %v1389
        %v1394 = vand.u32 2147483647, %v1377
        %vm1395 = vcmp.eq.f32.partialorder %v1394, 8.507059e+37
        %v1396 = vand.u32 %v1377, 2147483648
        %v1397 = vor.u32 1.1754944e-38, %v1396
        %v1398 = vsel %vm1395, %v1397, %v1393
        %v1399 = vmul.f32 1.0, %v1398
        %v1400 = vrcp.pop %v1378
        %v1401 = vmul.f32 %v1378, %v1400
        %v1402 = vsub.f32 1.0, %v1401
        %v1403 = vmul.f32 %v1400, %v1402
        %v1404 = vadd.f32 %v1400, %v1403
        %vm1405 = vweird.f32 %v1378
        %vm1406 = vweird.f32 %v1400
        %vm1407 = vmor %vm1405, %vm1406
        %v1408 = vsel %vm1407, %v1400, %v1404
        %v1409 = vand.u32 2147483647, %v1378
        %vm1410 = vcmp.eq.f32.partialorder %v1409, 8.507059e+37
        %v1411 = vand.u32 %v1378, 2147483648
        %v1412 = vor.u32 1.1754944e-38, %v1411
        %v1413 = vsel %vm1410, %v1412, %v1408
        %v1414 = vmul.f32 1.0, %v1413
        %v1415 = vrcp.pop %v1379
        %v1416 = vmul.f32 %v1379, %v1415
        %v1417 = vsub.f32 1.0, %v1416
        %v1418 = vmul.f32 %v1415, %v1417
        %v1419 = vadd.f32 %v1415, %v1418
        %vm1420 = vweird.f32 %v1379
        %vm1421 = vweird.f32 %v1415
        %vm1422 = vmor %vm1420, %vm1421
        %v1423 = vsel %vm1422, %v1415, %v1419
        %v1424 = vand.u32 2147483647, %v1379
        %vm1425 = vcmp.eq.f32.partialorder %v1424, 8.507059e+37
        %v1426 = vand.u32 %v1379, 2147483648
        %v1427 = vor.u32 1.1754944e-38, %v1426
        %v1428 = vsel %vm1425, %v1427, %v1423
        %v1429 = vmul.f32 1.0, %v1428
        %v1430 = vrcp.pop %v1380
        %v1431 = vmul.f32 %v1380, %v1430
        %v1432 = vsub.f32 1.0, %v1431
        %v1433 = vmul.f32 %v1430, %v1432
        %v1434 = vadd.f32 %v1430, %v1433
        %vm1435 = vweird.f32 %v1380
        %vm1436 = vweird.f32 %v1430
        %vm1437 = vmor %vm1435, %vm1436
        %v1438 = vsel %vm1437, %v1430, %v1434
        %v1439 = vand.u32 2147483647, %v1380
        %vm1440 = vcmp.eq.f32.partialorder %v1439, 8.507059e+37
        %v1441 = vand.u32 %v1380, 2147483648
        %v1442 = vor.u32 1.1754944e-38, %v1441
        %v1443 = vsel %vm1440, %v1442, %v1438
        %v1444 = vmul.f32 1.0, %v1443
        %v1445 = vrcp.pop %v1381
        %v1446 = vmul.f32 %v1381, %v1445
        %v1447 = vsub.f32 1.0, %v1446
        %v1448 = vmul.f32 %v1445, %v1447
        %v1449 = vadd.f32 %v1445, %v1448
        %vm1450 = vweird.f32 %v1381
        %vm1451 = vweird.f32 %v1445
        %vm1452 = vmor %vm1450, %vm1451
        %v1453 = vsel %vm1452, %v1445, %v1449
        %v1454 = vand.u32 2147483647, %v1381
        %vm1455 = vcmp.eq.f32.partialorder %v1454, 8.507059e+37
        %v1456 = vand.u32 %v1381, 2147483648
        %v1457 = vor.u32 1.1754944e-38, %v1456
        %v1458 = vsel %vm1455, %v1457, %v1453
        %v1459 = vmul.f32 1.0, %v1458
        %v1460 = vrcp.pop %v1382
        %v1461 = vmul.f32 %v1382, %v1460
        %v1462 = vsub.f32 1.0, %v1461
        %v1463 = vmul.f32 %v1460, %v1462
        %v1464 = vadd.f32 %v1460, %v1463
        %vm1465 = vweird.f32 %v1382
        %vm1466 = vweird.f32 %v1460
        %vm1467 = vmor %vm1465, %vm1466
        %v1468 = vsel %vm1467, %v1460, %v1464
        %v1469 = vand.u32 2147483647, %v1382
        %vm1470 = vcmp.eq.f32.partialorder %v1469, 8.507059e+37
        %v1471 = vand.u32 %v1382, 2147483648
        %v1472 = vor.u32 1.1754944e-38, %v1471
        %v1473 = vsel %vm1470, %v1472, %v1468
        %v1474 = vmul.f32 1.0, %v1473
        %v1475 = vrcp.pop %v1383
        %v1476 = vmul.f32 %v1383, %v1475
        %v1477 = vsub.f32 1.0, %v1476
        %v1478 = vmul.f32 %v1475, %v1477
        %v1479 = vadd.f32 %v1475, %v1478
        %vm1480 = vweird.f32 %v1383
        %vm1481 = vweird.f32 %v1475
        %vm1482 = vmor %vm1480, %vm1481
        %v1483 = vsel %vm1482, %v1475, %v1479
        %v1484 = vand.u32 2147483647, %v1383
        %vm1485 = vcmp.eq.f32.partialorder %v1484, 8.507059e+37
        %v1486 = vand.u32 %v1383, 2147483648
        %v1487 = vor.u32 1.1754944e-38, %v1486
        %v1488 = vsel %vm1485, %v1487, %v1483
        %v1489 = vmul.f32 1.0, %v1488
        %v1490 = vrcp.pop %v1384
        %v1491 = vmul.f32 %v1384, %v1490
        %v1492 = vsub.f32 1.0, %v1491
        %v1493 = vmul.f32 %v1490, %v1492
        %v1494 = vadd.f32 %v1490, %v1493
        %vm1495 = vweird.f32 %v1384
        %vm1496 = vweird.f32 %v1490
        %vm1497 = vmor %vm1495, %vm1496
        %v1498 = vsel %vm1497, %v1490, %v1494
        %v1499 = vand.u32 2147483647, %v1384
        %vm1500 = vcmp.eq.f32.partialorder %v1499, 8.507059e+37
        %v1501 = vand.u32 %v1384, 2147483648
        %v1502 = vor.u32 1.1754944e-38, %v1501
        %v1503 = vsel %vm1500, %v1502, %v1498
        %v1504 = vmul.f32 1.0, %v1503
        %v1509 = vperm.slane %v1399, %v544
        %v1510 = vperm.slane %v1414, %v546
        %v1511 = vsel %vm548, %v1510, %v1509
        %v1512 = vadd.s32 %v544, 4294967280
        %v1513 = vperm.slane %v1429, %v1512
        %vm1514 = vcmask 195712
        %v1515 = vsel %vm1514, %v1513, %v1511
        %v1516 = vadd.s32 %v544, 4294967272
        %v1517 = vperm.slane %v1444, %v1516
        %vm1518 = vcmask 261312
        %v1519 = vsel %vm1518, %v1517, %v1515
        %v1520 = vsel %vm597, %v1519, %v1519
        %v1521 = vsel %vm599, %v1519, %v1520
        %v1522 = vsel %vm601, %v1519, %v1521
        %v1523 = vsel %vm603, %v1519, %v1522
        %v1524 = vsel %vm605, %v1519, %v1523
        %v1525 = vsel %vm607, %v1519, %v1524
        %v1527 = vmul.f32 %v315, %v1525
        %v1528 = vmul.f32 %v316, %v1525
        %v1529 = vmul.f32 %v317, %v1525
        %v1530 = vmul.f32 %v318, %v1525
        %v1531 = vmul.f32 %v319, %v1525
        %v1532 = vmul.f32 %v320, %v1525
        %v1533 = vmul.f32 %v321, %v1525
        %v1534 = vmul.f32 %v322, %v1525
        %v1535 = vmul.f32 %v323, %v1525
        %v1536 = vmul.f32 %v324, %v1525
        %v1537 = vmul.f32 %v325, %v1525
        %v1538 = vmul.f32 %v326, %v1525
        %v1539 = vmul.f32 %v327, %v1525
        %v1540 = vmul.f32 %v328, %v1525
        %v1541 = vmul.f32 %v329, %v1525
        %v1542 = vmul.f32 %v330, %v1525
        %v1543 = vmul.f32 %v331, %v1525
        %v1544 = vmul.f32 %v332, %v1525
        %v1545 = vmul.f32 %v333, %v1525
        %v1546 = vmul.f32 %v334, %v1525
        %v1547 = vmul.f32 %v335, %v1525
        %v1548 = vmul.f32 %v336, %v1525
        %v1549 = vmul.f32 %v337, %v1525
        %v1550 = vmul.f32 %v338, %v1525
        %v1551 = vmul.f32 %v339, %v1525
        %v1552 = vmul.f32 %v340, %v1525
        %v1553 = vmul.f32 %v341, %v1525
        %v1554 = vmul.f32 %v342, %v1525
        %v1555 = vmul.f32 %v343, %v1525
        %v1556 = vmul.f32 %v344, %v1525
        %v1557 = vmul.f32 %v345, %v1525
        %v1558 = vmul.f32 %v346, %v1525
        %v1563 = vperm.slane %v1459, %v544
        %v1564 = vperm.slane %v1474, %v546
        %v1565 = vsel %vm548, %v1564, %v1563
        %v1566 = vperm.slane %v1489, %v1512
        %v1567 = vsel %vm1514, %v1566, %v1565
        %v1568 = vperm.slane %v1504, %v1516
        %v1569 = vsel %vm1518, %v1568, %v1567
        %v1570 = vsel %vm597, %v1569, %v1569
        %v1571 = vsel %vm599, %v1569, %v1570
        %v1572 = vsel %vm601, %v1569, %v1571
        %v1573 = vsel %vm603, %v1569, %v1572
        %v1574 = vsel %vm605, %v1569, %v1573
        %v1575 = vsel %vm607, %v1569, %v1574
        %v1577 = vmul.f32 %v347, %v1575
        %v1578 = vmul.f32 %v348, %v1575
        %v1579 = vmul.f32 %v349, %v1575
        %v1580 = vmul.f32 %v350, %v1575
        %v1581 = vmul.f32 %v351, %v1575
        %v1582 = vmul.f32 %v352, %v1575
        %v1583 = vmul.f32 %v353, %v1575
        %v1584 = vmul.f32 %v354, %v1575
        %v1585 = vmul.f32 %v355, %v1575
        %v1586 = vmul.f32 %v356, %v1575
        %v1587 = vmul.f32 %v357, %v1575
        %v1588 = vmul.f32 %v358, %v1575
        %v1589 = vmul.f32 %v359, %v1575
        %v1590 = vmul.f32 %v360, %v1575
        %v1591 = vmul.f32 %v361, %v1575
        %v1592 = vmul.f32 %v362, %v1575
        %v1593 = vmul.f32 %v363, %v1575
        %v1594 = vmul.f32 %v364, %v1575
        %v1595 = vmul.f32 %v365, %v1575
        %v1596 = vmul.f32 %v366, %v1575
        %v1597 = vmul.f32 %v367, %v1575
        %v1598 = vmul.f32 %v368, %v1575
        %v1599 = vmul.f32 %v369, %v1575
        %v1600 = vmul.f32 %v370, %v1575
        %v1601 = vmul.f32 %v371, %v1575
        %v1602 = vmul.f32 %v372, %v1575
        %v1603 = vmul.f32 %v373, %v1575
        %v1604 = vmul.f32 %v374, %v1575
        %v1605 = vmul.f32 %v375, %v1575
        %v1606 = vmul.f32 %v376, %v1575
        %v1607 = vmul.f32 %v377, %v1575
        %v1608 = vmul.f32 %v378, %v1575
        %1609 = vst.msk [vmem:[%s290] sm:$0xff] %vm411, %v1527
        %1610 = vst.msk [vmem:[%s290 + $0x8] sm:$0xff] %vm411, %v1528
        %1611 = vst.msk [vmem:[%s290 + $0x10] sm:$0xff] %vm411, %v1529
        %1612 = vst.msk [vmem:[%s290 + $0x18] sm:$0xff] %vm411, %v1530
        %1613 = vst.msk [vmem:[%s290 + $0x20] sm:$0xff] %vm411, %v1531
        %1614 = vst.msk [vmem:[%s290 + $0x28] sm:$0xff] %vm411, %v1532
        %1615 = vst.msk [vmem:[%s290 + $0x30] sm:$0xff] %vm411, %v1533
        %1616 = vst.msk [vmem:[%s290 + $0x38] sm:$0xff] %vm411, %v1534
        %1617 = vst.msk [vmem:[%s290 + $0x40] sm:$0xff] %vm411, %v1535
        %1618 = vst.msk [vmem:[%s290 + $0x48] sm:$0xff] %vm411, %v1536
        %1619 = vst.msk [vmem:[%s290 + $0x50] sm:$0xff] %vm411, %v1537
        %1620 = vst.msk [vmem:[%s290 + $0x58] sm:$0xff] %vm411, %v1538
        %1621 = vst.msk [vmem:[%s290 + $0x60] sm:$0xff] %vm411, %v1539
        %1622 = vst.msk [vmem:[%s290 + $0x68] sm:$0xff] %vm411, %v1540
        %1623 = vst.msk [vmem:[%s290 + $0x70] sm:$0xff] %vm411, %v1541
        %1624 = vst.msk [vmem:[%s290 + $0x78] sm:$0xff] %vm411, %v1542
        %1625 = vst.msk [vmem:[%s290 + $0x80] sm:$0xff] %vm411, %v1543
        %1626 = vst.msk [vmem:[%s290 + $0x88] sm:$0xff] %vm411, %v1544
        %1627 = vst.msk [vmem:[%s290 + $0x90] sm:$0xff] %vm411, %v1545
        %1628 = vst.msk [vmem:[%s290 + $0x98] sm:$0xff] %vm411, %v1546
        %1629 = vst.msk [vmem:[%s290 + $0xa0] sm:$0xff] %vm411, %v1547
        %1630 = vst.msk [vmem:[%s290 + $0xa8] sm:$0xff] %vm411, %v1548
        %1631 = vst.msk [vmem:[%s290 + $0xb0] sm:$0xff] %vm411, %v1549
        %1632 = vst.msk [vmem:[%s290 + $0xb8] sm:$0xff] %vm411, %v1550
        %1633 = vst.msk [vmem:[%s290 + $0xc0] sm:$0xff] %vm411, %v1551
        %1634 = vst.msk [vmem:[%s290 + $0xc8] sm:$0xff] %vm411, %v1552
        %1635 = vst.msk [vmem:[%s290 + $0xd0] sm:$0xff] %vm411, %v1553
        %1636 = vst.msk [vmem:[%s290 + $0xd8] sm:$0xff] %vm411, %v1554
        %1637 = vst.msk [vmem:[%s290 + $0xe0] sm:$0xff] %vm411, %v1555
        %1638 = vst.msk [vmem:[%s290 + $0xe8] sm:$0xff] %vm411, %v1556
        %1639 = vst.msk [vmem:[%s290 + $0xf0] sm:$0xff] %vm411, %v1557
        %1640 = vst.msk [vmem:[%s290 + $0xf8] sm:$0xff] %vm411, %v1558
        %1641 = vst.msk [vmem:[%s297] sm:$0xff] %vm411, %v1577
        %1642 = vst.msk [vmem:[%s297 + $0x8] sm:$0xff] %vm411, %v1578
        %1643 = vst.msk [vmem:[%s297 + $0x10] sm:$0xff] %vm411, %v1579
        %1644 = vst.msk [vmem:[%s297 + $0x18] sm:$0xff] %vm411, %v1580
        %1645 = vst.msk [vmem:[%s297 + $0x20] sm:$0xff] %vm411, %v1581
        %1646 = vst.msk [vmem:[%s297 + $0x28] sm:$0xff] %vm411, %v1582
        %1647 = vst.msk [vmem:[%s297 + $0x30] sm:$0xff] %vm411, %v1583
        %1648 = vst.msk [vmem:[%s297 + $0x38] sm:$0xff] %vm411, %v1584
        %1649 = vst.msk [vmem:[%s297 + $0x40] sm:$0xff] %vm411, %v1585
        %1650 = vst.msk [vmem:[%s297 + $0x48] sm:$0xff] %vm411, %v1586
        %1651 = vst.msk [vmem:[%s297 + $0x50] sm:$0xff] %vm411, %v1587
        %1652 = vst.msk [vmem:[%s297 + $0x58] sm:$0xff] %vm411, %v1588
        %1653 = vst.msk [vmem:[%s297 + $0x60] sm:$0xff] %vm411, %v1589
        %1654 = vst.msk [vmem:[%s297 + $0x68] sm:$0xff] %vm411, %v1590
        %1655 = vst.msk [vmem:[%s297 + $0x70] sm:$0xff] %vm411, %v1591
        %1656 = vst.msk [vmem:[%s297 + $0x78] sm:$0xff] %vm411, %v1592
        %1657 = vst.msk [vmem:[%s297 + $0x80] sm:$0xff] %vm411, %v1593
        %1658 = vst.msk [vmem:[%s297 + $0x88] sm:$0xff] %vm411, %v1594
        %1659 = vst.msk [vmem:[%s297 + $0x90] sm:$0xff] %vm411, %v1595
        %1660 = vst.msk [vmem:[%s297 + $0x98] sm:$0xff] %vm411, %v1596
        %1661 = vst.msk [vmem:[%s297 + $0xa0] sm:$0xff] %vm411, %v1597
        %1662 = vst.msk [vmem:[%s297 + $0xa8] sm:$0xff] %vm411, %v1598
        %1663 = vst.msk [vmem:[%s297 + $0xb0] sm:$0xff] %vm411, %v1599
        %1664 = vst.msk [vmem:[%s297 + $0xb8] sm:$0xff] %vm411, %v1600
        %1665 = vst.msk [vmem:[%s297 + $0xc0] sm:$0xff] %vm411, %v1601
        %1666 = vst.msk [vmem:[%s297 + $0xc8] sm:$0xff] %vm411, %v1602
        %1667 = vst.msk [vmem:[%s297 + $0xd0] sm:$0xff] %vm411, %v1603
        %1668 = vst.msk [vmem:[%s297 + $0xd8] sm:$0xff] %vm411, %v1604
        %1669 = vst.msk [vmem:[%s297 + $0xe0] sm:$0xff] %vm411, %v1605
        %1670 = vst.msk [vmem:[%s297 + $0xe8] sm:$0xff] %vm411, %v1606
        %1671 = vst.msk [vmem:[%s297 + $0xf0] sm:$0xff] %vm411, %v1607
        %1672 = vst.msk [vmem:[%s297 + $0xf8] sm:$0xff] %vm411, %v1608
        %v1673 = vmul.f32 %v1527, %v1577
        %v1674 = vmul.f32 %v1528, %v1578
        %v1675 = vmul.f32 %v1529, %v1579
        %v1676 = vmul.f32 %v1530, %v1580
        %v1677 = vmul.f32 %v1531, %v1581
        %v1678 = vmul.f32 %v1532, %v1582
        %v1679 = vmul.f32 %v1533, %v1583
        %v1680 = vmul.f32 %v1534, %v1584
        %v1681 = vmul.f32 %v1535, %v1585
        %v1682 = vmul.f32 %v1536, %v1586
        %v1683 = vmul.f32 %v1537, %v1587
        %v1684 = vmul.f32 %v1538, %v1588
        %v1685 = vmul.f32 %v1539, %v1589
        %v1686 = vmul.f32 %v1540, %v1590
        %v1687 = vmul.f32 %v1541, %v1591
        %v1688 = vmul.f32 %v1542, %v1592
        %v1689 = vmul.f32 %v1543, %v1593
        %v1690 = vmul.f32 %v1544, %v1594
        %v1691 = vmul.f32 %v1545, %v1595
        %v1692 = vmul.f32 %v1546, %v1596
        %v1693 = vmul.f32 %v1547, %v1597
        %v1694 = vmul.f32 %v1548, %v1598
        %v1695 = vmul.f32 %v1549, %v1599
        %v1696 = vmul.f32 %v1550, %v1600
        %v1697 = vmul.f32 %v1551, %v1601
        %v1698 = vmul.f32 %v1552, %v1602
        %v1699 = vmul.f32 %v1553, %v1603
        %v1700 = vmul.f32 %v1554, %v1604
        %v1701 = vmul.f32 %v1555, %v1605
        %v1702 = vmul.f32 %v1556, %v1606
        %v1703 = vmul.f32 %v1557, %v1607
        %v1704 = vmul.f32 %v1558, %v1608
        %1705 = vst.msk [vmem:[%s304] sm:$0xff] %vm411, %v1673
        %1706 = vst.msk [vmem:[%s304 + $0x8] sm:$0xff] %vm411, %v1674
        %1707 = vst.msk [vmem:[%s304 + $0x10] sm:$0xff] %vm411, %v1675
        %1708 = vst.msk [vmem:[%s304 + $0x18] sm:$0xff] %vm411, %v1676
        %1709 = vst.msk [vmem:[%s304 + $0x20] sm:$0xff] %vm411, %v1677
        %1710 = vst.msk [vmem:[%s304 + $0x28] sm:$0xff] %vm411, %v1678
        %1711 = vst.msk [vmem:[%s304 + $0x30] sm:$0xff] %vm411, %v1679
        %1712 = vst.msk [vmem:[%s304 + $0x38] sm:$0xff] %vm411, %v1680
        %1713 = vst.msk [vmem:[%s304 + $0x40] sm:$0xff] %vm411, %v1681
        %1714 = vst.msk [vmem:[%s304 + $0x48] sm:$0xff] %vm411, %v1682
        %1715 = vst.msk [vmem:[%s304 + $0x50] sm:$0xff] %vm411, %v1683
        %1716 = vst.msk [vmem:[%s304 + $0x58] sm:$0xff] %vm411, %v1684
        %1717 = vst.msk [vmem:[%s304 + $0x60] sm:$0xff] %vm411, %v1685
        %1718 = vst.msk [vmem:[%s304 + $0x68] sm:$0xff] %vm411, %v1686
        %1719 = vst.msk [vmem:[%s304 + $0x70] sm:$0xff] %vm411, %v1687
        %1720 = vst.msk [vmem:[%s304 + $0x78] sm:$0xff] %vm411, %v1688
        %1721 = vst.msk [vmem:[%s304 + $0x80] sm:$0xff] %vm411, %v1689
        %1722 = vst.msk [vmem:[%s304 + $0x88] sm:$0xff] %vm411, %v1690
        %1723 = vst.msk [vmem:[%s304 + $0x90] sm:$0xff] %vm411, %v1691
        %1724 = vst.msk [vmem:[%s304 + $0x98] sm:$0xff] %vm411, %v1692
        %1725 = vst.msk [vmem:[%s304 + $0xa0] sm:$0xff] %vm411, %v1693
        %1726 = vst.msk [vmem:[%s304 + $0xa8] sm:$0xff] %vm411, %v1694
        %1727 = vst.msk [vmem:[%s304 + $0xb0] sm:$0xff] %vm411, %v1695
        %1728 = vst.msk [vmem:[%s304 + $0xb8] sm:$0xff] %vm411, %v1696
        %1729 = vst.msk [vmem:[%s304 + $0xc0] sm:$0xff] %vm411, %v1697
        %1730 = vst.msk [vmem:[%s304 + $0xc8] sm:$0xff] %vm411, %v1698
        %1731 = vst.msk [vmem:[%s304 + $0xd0] sm:$0xff] %vm411, %v1699
        %1732 = vst.msk [vmem:[%s304 + $0xd8] sm:$0xff] %vm411, %v1700
        %1733 = vst.msk [vmem:[%s304 + $0xe0] sm:$0xff] %vm411, %v1701
        %1734 = vst.msk [vmem:[%s304 + $0xe8] sm:$0xff] %vm411, %v1702
        %1735 = vst.msk [vmem:[%s304 + $0xf0] sm:$0xff] %vm411, %v1703
        %1736 = vst.msk [vmem:[%s304 + $0xf8] sm:$0xff] %vm411, %v1704
        %v1737 = vadd.f32 %v1527, %v1577
        %v1738 = vadd.f32 %v1528, %v1578
        %v1739 = vadd.f32 %v1529, %v1579
        %v1740 = vadd.f32 %v1530, %v1580
        %v1741 = vadd.f32 %v1531, %v1581
        %v1742 = vadd.f32 %v1532, %v1582
        %v1743 = vadd.f32 %v1533, %v1583
        %v1744 = vadd.f32 %v1534, %v1584
        %v1745 = vadd.f32 %v1535, %v1585
        %v1746 = vadd.f32 %v1536, %v1586
        %v1747 = vadd.f32 %v1537, %v1587
        %v1748 = vadd.f32 %v1538, %v1588
        %v1749 = vadd.f32 %v1539, %v1589
        %v1750 = vadd.f32 %v1540, %v1590
        %v1751 = vadd.f32 %v1541, %v1591
        %v1752 = vadd.f32 %v1542, %v1592
        %v1753 = vadd.f32 %v1543, %v1593
        %v1754 = vadd.f32 %v1544, %v1594
        %v1755 = vadd.f32 %v1545, %v1595
        %v1756 = vadd.f32 %v1546, %v1596
        %v1757 = vadd.f32 %v1547, %v1597
        %v1758 = vadd.f32 %v1548, %v1598
        %v1759 = vadd.f32 %v1549, %v1599
        %v1760 = vadd.f32 %v1550, %v1600
        %v1761 = vadd.f32 %v1551, %v1601
        %v1762 = vadd.f32 %v1552, %v1602
        %v1763 = vadd.f32 %v1553, %v1603
        %v1764 = vadd.f32 %v1554, %v1604
        %v1765 = vadd.f32 %v1555, %v1605
        %v1766 = vadd.f32 %v1556, %v1606
        %v1767 = vadd.f32 %v1557, %v1607
        %v1768 = vadd.f32 %v1558, %v1608
        %1801 = vrot.lane.b32.xlu0 %v1737, 32
        %v1802 = vpop.permute.xlu0 %1801
        %1803 = vrot.lane.b32.xlu0 %v1738, 32
        %v1804 = vpop.permute.xlu0 %1803
        %1805 = vrot.lane.b32.xlu0 %v1739, 32
        %v1806 = vpop.permute.xlu0 %1805
        %1807 = vrot.lane.b32.xlu0 %v1740, 32
        %v1808 = vpop.permute.xlu0 %1807
        %1809 = vrot.lane.b32.xlu0 %v1741, 32
        %v1810 = vpop.permute.xlu0 %1809
        %1811 = vrot.lane.b32.xlu0 %v1742, 32
        %v1812 = vpop.permute.xlu0 %1811
        %1813 = vrot.lane.b32.xlu0 %v1743, 32
        %v1814 = vpop.permute.xlu0 %1813
        %1815 = vrot.lane.b32.xlu0 %v1744, 32
        %v1816 = vpop.permute.xlu0 %1815
        %1817 = vrot.lane.b32.xlu0 %v1745, 32
        %v1818 = vpop.permute.xlu0 %1817
        %1819 = vrot.lane.b32.xlu0 %v1746, 32
        %v1820 = vpop.permute.xlu0 %1819
        %1821 = vrot.lane.b32.xlu0 %v1747, 32
        %v1822 = vpop.permute.xlu0 %1821
        %1823 = vrot.lane.b32.xlu0 %v1748, 32
        %v1824 = vpop.permute.xlu0 %1823
        %1825 = vrot.lane.b32.xlu0 %v1749, 32
        %v1826 = vpop.permute.xlu0 %1825
        %1827 = vrot.lane.b32.xlu0 %v1750, 32
        %v1828 = vpop.permute.xlu0 %1827
        %1829 = vrot.lane.b32.xlu0 %v1751, 32
        %v1830 = vpop.permute.xlu0 %1829
        %1831 = vrot.lane.b32.xlu0 %v1752, 32
        %v1832 = vpop.permute.xlu0 %1831
        %1833 = vrot.lane.b32.xlu0 %v1753, 32
        %v1834 = vpop.permute.xlu0 %1833
        %1835 = vrot.lane.b32.xlu0 %v1754, 32
        %v1836 = vpop.permute.xlu0 %1835
        %1837 = vrot.lane.b32.xlu0 %v1755, 32
        %v1838 = vpop.permute.xlu0 %1837
        %1839 = vrot.lane.b32.xlu0 %v1756, 32
        %v1840 = vpop.permute.xlu0 %1839
        %1841 = vrot.lane.b32.xlu0 %v1757, 32
        %v1842 = vpop.permute.xlu0 %1841
        %1843 = vrot.lane.b32.xlu0 %v1758, 32
        %v1844 = vpop.permute.xlu0 %1843
        %1845 = vrot.lane.b32.xlu0 %v1759, 32
        %v1846 = vpop.permute.xlu0 %1845
        %1847 = vrot.lane.b32.xlu0 %v1760, 32
        %v1848 = vpop.permute.xlu0 %1847
        %1849 = vrot.lane.b32.xlu0 %v1761, 32
        %v1850 = vpop.permute.xlu0 %1849
        %1851 = vrot.lane.b32.xlu0 %v1762, 32
        %v1852 = vpop.permute.xlu0 %1851
        %1853 = vrot.lane.b32.xlu0 %v1763, 32
        %v1854 = vpop.permute.xlu0 %1853
        %1855 = vrot.lane.b32.xlu0 %v1764, 32
        %v1856 = vpop.permute.xlu0 %1855
        %1857 = vrot.lane.b32.xlu0 %v1765, 32
        %v1858 = vpop.permute.xlu0 %1857
        %1859 = vrot.lane.b32.xlu0 %v1766, 32
        %v1860 = vpop.permute.xlu0 %1859
        %1861 = vrot.lane.b32.xlu0 %v1767, 32
        %v1862 = vpop.permute.xlu0 %1861
        %1863 = vrot.lane.b32.xlu0 %v1768, 32
        %v1864 = vpop.permute.xlu0 %1863
        %vm1897 = vcmask 523520
        %1898 = vst.msk [vmem:[%s304] sm:$0xff] %vm1897, %v1802
        %1899 = vst.msk [vmem:[%s304 + $0x8] sm:$0xff] %vm1897, %v1804
        %1900 = vst.msk [vmem:[%s304 + $0x10] sm:$0xff] %vm1897, %v1806
        %1901 = vst.msk [vmem:[%s304 + $0x18] sm:$0xff] %vm1897, %v1808
        %1902 = vst.msk [vmem:[%s304 + $0x20] sm:$0xff] %vm1897, %v1810
        %1903 = vst.msk [vmem:[%s304 + $0x28] sm:$0xff] %vm1897, %v1812
        %1904 = vst.msk [vmem:[%s304 + $0x30] sm:$0xff] %vm1897, %v1814
        %1905 = vst.msk [vmem:[%s304 + $0x38] sm:$0xff] %vm1897, %v1816
        %1906 = vst.msk [vmem:[%s304 + $0x40] sm:$0xff] %vm1897, %v1818
        %1907 = vst.msk [vmem:[%s304 + $0x48] sm:$0xff] %vm1897, %v1820
        %1908 = vst.msk [vmem:[%s304 + $0x50] sm:$0xff] %vm1897, %v1822
        %1909 = vst.msk [vmem:[%s304 + $0x58] sm:$0xff] %vm1897, %v1824
        %1910 = vst.msk [vmem:[%s304 + $0x60] sm:$0xff] %vm1897, %v1826
        %1911 = vst.msk [vmem:[%s304 + $0x68] sm:$0xff] %vm1897, %v1828
        %1912 = vst.msk [vmem:[%s304 + $0x70] sm:$0xff] %vm1897, %v1830
        %1913 = vst.msk [vmem:[%s304 + $0x78] sm:$0xff] %vm1897, %v1832
        %1914 = vst.msk [vmem:[%s304 + $0x80] sm:$0xff] %vm1897, %v1834
        %1915 = vst.msk [vmem:[%s304 + $0x88] sm:$0xff] %vm1897, %v1836
        %1916 = vst.msk [vmem:[%s304 + $0x90] sm:$0xff] %vm1897, %v1838
        %1917 = vst.msk [vmem:[%s304 + $0x98] sm:$0xff] %vm1897, %v1840
        %1918 = vst.msk [vmem:[%s304 + $0xa0] sm:$0xff] %vm1897, %v1842
        %1919 = vst.msk [vmem:[%s304 + $0xa8] sm:$0xff] %vm1897, %v1844
        %1920 = vst.msk [vmem:[%s304 + $0xb0] sm:$0xff] %vm1897, %v1846
        %1921 = vst.msk [vmem:[%s304 + $0xb8] sm:$0xff] %vm1897, %v1848
        %1922 = vst.msk [vmem:[%s304 + $0xc0] sm:$0xff] %vm1897, %v1850
        %1923 = vst.msk [vmem:[%s304 + $0xc8] sm:$0xff] %vm1897, %v1852
        %1924 = vst.msk [vmem:[%s304 + $0xd0] sm:$0xff] %vm1897, %v1854
        %1925 = vst.msk [vmem:[%s304 + $0xd8] sm:$0xff] %vm1897, %v1856
        %1926 = vst.msk [vmem:[%s304 + $0xe0] sm:$0xff] %vm1897, %v1858
        %1927 = vst.msk [vmem:[%s304 + $0xe8] sm:$0xff] %vm1897, %v1860
        %1928 = vst.msk [vmem:[%s304 + $0xf0] sm:$0xff] %vm1897, %v1862
        %1929 = vst.msk [vmem:[%s304 + $0xf8] sm:$0xff] %vm1897, %v1864
        %s1930 = sand.u32 %s148, 1
        %s1931 = scalar_lea.sflag [#allocation3], %s1930
        %s1932 = sand.u32 %s148, 1
        %s1933 = smul.addr %s1932, 256
        %s1934 = scalar_lea.vmem [#allocation2], %s1933
        %s1935 = sand.u32 %s25, 1
        %s1936 = scalar_lea.sflag [#allocation5], %s1935
        %s1937 = sand.u32 %s174, 1
        %s1938 = smul.addr %s1937, 256
        %s1939 = scalar_lea.vmem [#allocation4], %s1938
        %s1940 = sand.u32 %s25, 1
        %s1941 = scalar_lea.sflag [#allocation5], %s1940
        %s1942 = sand.u32 %s200, 1
        %s1943 = smul.addr %s1942, 256
        %s1944 = scalar_lea.vmem [#allocation6], %s1943
        // Predicated region
        $region41: #{cfem_left.1} parent=39 // pred_check
          %p1945 = pneg %p158
        $region42: #{cfem_left.1} parent=39 // pred_check_branch
          %1947 = sbr.rel (%p1945) target = $region44
        $region43: #{cfem_left.1} parent=39 // pred_region
          %1949 = vsyncadd %s1931, 0
          %s1950 = smul.addr %s25, 32
          %s1951 = smul.addr %s1950, 8
          %s1952 = scalar_lea.hbm %s5, %s1951
          %s1953 = sshll.u32 %s1934, 4
          %s1954 = int_to_ptr.vmem [resolvable:$true] %s1953
          %s1955 = sshll.u32 %s1952, 4
          %s1956 = int_to_ptr.hbm [resolvable:$true] %s1955
          %1961 = dma.vmem_to_hbm [thread:$0]  %s1954, 4096, %s1956, %s1931, 128, 128, 8
        $region44: #{cfem_left.1} parent=39 // pred_fallthru
          _
        // Predicated region
        $region45: #{cfem_left.1} parent=39 // pred_check
          %p1962 = pneg %p184
        $region46: #{cfem_left.1} parent=39 // pred_check_branch
          %1964 = sbr.rel (%p1962) target = $region48
        $region47: #{cfem_left.1} parent=39 // pred_region
          %1966 = vsyncadd %s1936, 0
          %s1967 = smul.addr %s25, 32
          %s1968 = smul.addr %s1967, 8
          %s1969 = scalar_lea.hbm %s6, %s1968
          %s1970 = sshll.u32 %s1939, 4
          %s1971 = int_to_ptr.vmem [resolvable:$true] %s1970
          %s1972 = sshll.u32 %s1969, 4
          %s1973 = int_to_ptr.hbm [resolvable:$true] %s1972
          %1978 = dma.vmem_to_hbm [thread:$0]  %s1971, 4096, %s1973, %s1936, 128, 128, 8
        $region48: #{cfem_left.1} parent=39 // pred_fallthru
          _
        // Predicated region
        $region49: #{cfem_left.1} parent=39 // pred_check
          %p1979 = pneg %p210
        $region50: #{cfem_left.1} parent=39 // pred_check_branch
          %1981 = sbr.rel (%p1979) target = $region52
        $region51: #{cfem_left.1} parent=39 // pred_region
          %1983 = vsyncadd %s1941, 0
          %s1984 = smul.addr %s25, 32
          %s1985 = smul.addr %s1984, 8
          %s1986 = scalar_lea.hbm %s7, %s1985
          %s1987 = sshll.u32 %s1944, 4
          %s1988 = int_to_ptr.vmem [resolvable:$true] %s1987
          %s1989 = sshll.u32 %s1986, 4
          %s1990 = int_to_ptr.hbm [resolvable:$true] %s1989
          %1995 = dma.vmem_to_hbm [thread:$0]  %s1988, 4096, %s1990, %s1941, 128, 128, 8
        $region52: #{cfem_left.1} parent=39 // pred_fallthru
          _
      $region40: #{cfem_left.1} parent=5 // pred_fallthru
        _
      %p1996 = scmp.le.s32.totalorder 2, %s20
      // Predicated region
      $region53: #{cfem_left.1} parent=5 // pred_check
        %p1997 = pneg %p1996
      $region54: #{cfem_left.1} parent=5 // pred_check_branch
        %1999 = sbr.rel (%p1997) target = $region56
      $region55: #{cfem_left.1} parent=5 // pred_region
        %s2000 = ssub.s32 %s20, 2
        // Predicated region
        $region57: #{cfem_left.1} parent=55 // pred_check
          %p2001 = pneg %p164
        $region58: #{cfem_left.1} parent=55 // pred_check_branch
          %2003 = sbr.rel (%p2001) target = $region60
        $region59: #{cfem_left.1} parent=55 // pred_region
          %s2004 = sand.u32 %s149, 1
          %s2005 = scalar_lea.sflag [#allocation3], %s2004
          %s2006 = sand.u32 %s149, 1
          %s2007 = smul.addr %s2006, 256
          %s2008 = scalar_lea.vmem [#allocation2], %s2007
          %2010 = dma.done %s2005, 4096
        $region60: #{cfem_left.1} parent=55 // pred_fallthru
          _
        // Predicated region
        $region61: #{cfem_left.1} parent=55 // pred_check
          %p2011 = pneg %p190
        $region62: #{cfem_left.1} parent=55 // pred_check_branch
          %2013 = sbr.rel (%p2011) target = $region64
        $region63: #{cfem_left.1} parent=55 // pred_region
          %s2014 = sand.u32 %s26, 1
          %s2015 = scalar_lea.sflag [#allocation5], %s2014
          %s2016 = sand.u32 %s175, 1
          %s2017 = smul.addr %s2016, 256
          %s2018 = scalar_lea.vmem [#allocation4], %s2017
          %2020 = dma.done %s2015, 4096
        $region64: #{cfem_left.1} parent=55 // pred_fallthru
          _
        // Predicated region
        $region65: #{cfem_left.1} parent=55 // pred_check
          %p2021 = pneg %p216
        $region66: #{cfem_left.1} parent=55 // pred_check_branch
          %2023 = sbr.rel (%p2021) target = $region68
        $region67: #{cfem_left.1} parent=55 // pred_region
          %s2024 = sand.u32 %s26, 1
          %s2025 = scalar_lea.sflag [#allocation5], %s2024
          %s2026 = sand.u32 %s201, 1
          %s2027 = smul.addr %s2026, 256
          %s2028 = scalar_lea.vmem [#allocation6], %s2027
          %2030 = dma.done %s2025, 4096
        $region68: #{cfem_left.1} parent=55 // pred_fallthru
          _
      $region56: #{cfem_left.1} parent=5 // pred_fallthru
        _
    $region6: #{cfem_left.1} parent=1 // loop_footer
      %s24 = sadd.s32 1, %s20
    $region7: #{cfem_left.1} parent=1 // loop_footer_branch
      %19 = sbr.rel target = $region3
    $region8: #{cfem_left.1} parent=1 // loop_exit
      _
    %2031 = vsyncpa [#allocation3], 1
    %s2032 = scalar_lea.sflag [#allocation3], 1
    %2033 = vsyncpa %s2032, 1
    %2034 = vsyncpa [#allocation5], 1
    %s2035 = scalar_lea.sflag [#allocation5], 1
    %2036 = vsyncpa %s2035, 1

</llo_original>
